<compile_context>
chip_gen: v6e
topology: v6e:2x2x1
jax: 0.10.0
libtpu: 0.0.40
codegen_flags: <defaults>
</compile_context>

<pallas_src>
import jax
import jax.numpy as jnp
import numpy as np
from jax.experimental import pallas as pl
from jax.experimental.pallas import tpu as pltpu


# ---------- elementwise helpers ----------
def _softplus(x):
    return jnp.maximum(x, 0.0) + jnp.log(1.0 + jnp.exp(-jnp.abs(x)))


def _silu_kernel(x):
    # EUP path: exp + (exact) reciprocal instead of a generic VPU divide.
    return x * pl.reciprocal(1.0 + jnp.exp(-x))


def _silu_ref(x):
    return x / (1.0 + jnp.exp(-x))


def _vpu_matmul(a, w_t):
    """(M, K) @ (K, N) as K unrolled broadcast-FMAs on the VPU (K is tiny here).

    TODO(synk): for K / N beyond a few vregs switch back to jnp.dot (MXU)."""
    k_dim = w_t.shape[0]
    acc = a[:, 0:1] * w_t[0:1, :]
    for k in range(1, k_dim):
        acc = acc + a[:, k : k + 1] * w_t[k : k + 1, :]
    return acc


# ----------------------------------- Pallas kernel -----------------------------------
def mamba_next_token_kernel(
    x_ref,          # (B, d_model, L)                  NCL, exactly as PyTorch hands it over
    w_in_t_ref,     # (d_model, 2*d_inner)             in_proj.weight.T   (no bias)
    w_conv_t_ref,   # (d_conv, d_inner)                depthwise conv weights, time-major
    b_conv_ref,     # (1, d_inner)
    w_x_t_ref,      # (d_inner, dt_rank + 2*d_state)   x_proj.weight.T    (no bias)
    w_dt_t_ref,     # (dt_rank, d_inner)               dt_proj.weight.T
    b_dt_ref,       # (1, d_inner)                     dt_proj.bias
    neg_a_t_ref,    # (d_state, d_inner)               (-exp(A_log)).T, precomputed host-side
    d_skip_ref,     # (1, d_inner)                     D
    w_fused_t_ref,  # (d_inner, d_model)               (W_proj @ W_out).T  (out_proj+proj fused)
    b_proj_ref,     # (1, d_model)                     proj.bias
    o_ref,          # (B, d_model, L)                  NCL output
    y_sc,           # VMEM scratch (L, d_inner)        scan output rows
):
    B = x_ref.shape[0]
    L = x_ref.shape[2]
    d_inner = b_conv_ref.shape[1]
    d_state = neg_a_t_ref.shape[0]
    dt_rank = w_dt_t_ref.shape[0]
    d_conv = w_conv_t_ref.shape[0]

    # Hoist all weight loads out of the batch loop (loaded once, reused).
    w_in_t = w_in_t_ref[...]
    w_conv_t = w_conv_t_ref[...]
    b_conv = b_conv_ref[...]
    w_x_t = w_x_t_ref[...]
    w_dt_t = w_dt_t_ref[...]
    b_dt = b_dt_ref[...]
    a_t = neg_a_t_ref[...]
    d_skip = d_skip_ref[...]
    w_fused_t = w_fused_t_ref[...]
    b_proj = b_proj_ref[...]

    # Static unroll over the (small) batch: the B recurrences are independent chains,
    # which gives the scheduler ILP across the serial scans.
    # TODO(synk): for long L replace the unrolled t-loop with lax.fori_loop + an L-blocked
    # 'arbitrary' grid axis so the VMEM working set stays bounded (v7x has only 64 MiB).
    for b in range(B):
        xt = x_ref[b].astype(jnp.float32).T                         # (L, d_model)

        # ---- in_proj (no bias): d_model VPU FMAs ----
        xz = _vpu_matmul(xt, w_in_t)                                 # (L, 2*d_inner)
        x_pre = xz[:, :d_inner]
        z = xz[:, d_inner:]

        # ---- causal depthwise conv1d: one up-front zero pad + d_conv static slices ----
        xp = jnp.concatenate(
            [jnp.zeros((d_conv - 1, d_inner), jnp.float32), x_pre], axis=0)
        xconv = b_conv
        for k in range(d_conv):
            xconv = xconv + xp[k : k + L, :] * w_conv_t[k : k + 1, :]
        xs = _silu_kernel(xconv)                                     # (L, d_inner)

        # ---- x_proj -> [dt_in | B | C]: d_inner VPU FMAs ----
        x_dbl = _vpu_matmul(xs, w_x_t)                               # (L, dt_rank+2*d_state)
        dt_in = x_dbl[:, :dt_rank]                                   # (L, dt_rank)
        b_mat = x_dbl[:, dt_rank : dt_rank + d_state]                # (L, d_state)
        c_mat = x_dbl[:, dt_rank + d_state :]                        # (L, d_state)

        # ---- dt_proj (+bias), softplus: dt_rank VPU FMAs ----
        dt = _softplus(_vpu_matmul(dt_in, w_dt_t) + b_dt)            # (L, d_inner)

        dtx = dt * xs                                                # (L, d_inner)
        dx = xs * d_skip                                             # (L, d_inner)  D*u skip
        b_t = b_mat.T                                                # (d_state, L)
        c_t = c_mat.T                                                # (d_state, L)

        # ---- hoisted off the serial chain: per-step discretization (EUP exp + broadcasts)
        #      precomputed so the recurrence below is a single VPU FMA per step. ----
        dA = [jnp.exp(dt[t : t + 1, :] * a_t) for t in range(L)]         # (d_state, d_inner)
        dBx = [b_t[:, t : t + 1] * dtx[t : t + 1, :] for t in range(L)]  # (d_state, d_inner)

        # ---- selective scan: serial chain is only h = dA*h + dBx. The C-contraction is
        #      off-chain VPU/XLU work (no MXU round trip) written into a VMEM scratch row. ----
        h = jnp.zeros((d_state, d_inner), jnp.float32)
        for t in range(L):
            h = dA[t] * h + dBx[t]
            y_sc[t : t + 1, :] = jnp.sum(c_t[:, t : t + 1] * h, axis=0, keepdims=True)

        # ---- skip, gate, fused (proj @ out_proj) + bias: d_inner VPU FMAs ----
        y = (y_sc[...] + dx) * _silu_kernel(z)                       # (L, d_inner)
        out = _vpu_matmul(y, w_fused_t) + b_proj                     # (L, d_model)

        # NCL write-back: L sits on the lane axis -> lane-dense store.
        o_ref[b] = out.T.astype(o_ref.dtype)


# ----------------------------------- wrapper -----------------------------------
def mamba_next_token(x, params):
    """x: (B, d_model, L) float32 (PyTorch NCL layout).  Returns (B, d_model, L) float32."""
    B, d_model, L = x.shape
    d_inner = params["D"].shape[0]

    # Host-side *parameter-only* preprocessing (transposes / constant folding):
    #   A = -exp(A_log) folded in; out_proj and the final Linear fused into one matrix.
    w_fused_t = (params["w_proj"] @ params["w_out"]).T               # (d_inner, d_model)
    weights = [
        params["w_in"].T,                 # (d_model, 2*d_inner)
        params["w_conv"].T,               # (d_conv, d_inner)
        params["b_conv"][None, :],        # (1, d_inner)
        params["w_x"].T,                  # (d_inner, dt_rank + 2*d_state)
        params["w_dt"].T,                 # (dt_rank, d_inner)
        params["b_dt"][None, :],          # (1, d_inner)
        (-jnp.exp(params["A_log"])).T,    # (d_state, d_inner)
        params["D"][None, :],             # (1, d_inner)
        w_fused_t,                        # (d_inner, d_model)
        params["b_proj"][None, :],        # (1, d_model)
    ]

    # Single grid step: the whole problem is a few KB, so per-step overhead dominates any
    # tiling.  (For large B prefer grid=(B,) with dimension_semantics=("parallel",) so the
    # v7x megacore can shard the batch.)
    in_specs = [pl.BlockSpec((B, d_model, L), lambda i: (0, 0, 0))]
    for w in weights:
        in_specs.append(pl.BlockSpec(w.shape, lambda i, n=w.ndim: (0,) * n))

    return pl.pallas_call(
        mamba_next_token_kernel,
        out_shape=jax.ShapeDtypeStruct((B, d_model, L), jnp.float32),
        grid=(1,),
        in_specs=in_specs,
        out_specs=pl.BlockSpec((B, d_model, L), lambda i: (0, 0, 0)),
        scratch_shapes=[pltpu.VMEM((L, d_inner), jnp.float32)],
        compiler_params=pltpu.CompilerParams(dimension_semantics=("arbitrary",)),
    )(x.astype(jnp.float32), *weights)


# ------------------------- deterministic parameter init -------------------------
def init_params(key, d_model=2, d_state=16, d_conv=4, expand=2):
    d_inner = expand * d_model
    dt_rank = max(1, -(-d_model // 16))                              # ceil(d_model/16)
    ks = jax.random.split(key, 8)
    p = {}
    p["w_in"] = 0.2 * jax.random.normal(ks[0], (2 * d_inner, d_model), jnp.float32)
    p["w_conv"] = 0.3 * jax.random.normal(ks[1], (d_inner, d_conv), jnp.float32)
    p["b_conv"] = 0.1 * jax.random.normal(ks[2], (d_inner,), jnp.float32)
    p["w_x"] = 0.2 * jax.random.normal(ks[3], (dt_rank + 2 * d_state, d_inner), jnp.float32)
    p["w_dt"] = 0.5 * jax.random.normal(ks[4], (d_inner, dt_rank), jnp.float32)
    p["b_dt"] = jnp.log(jnp.expm1(jnp.linspace(0.01, 0.1, d_inner, dtype=jnp.float32)))
    p["A_log"] = jnp.log(jnp.tile(jnp.arange(1, d_state + 1, dtype=jnp.float32)[None, :],
                                  (d_inner, 1)))                     # (d_inner, d_state)
    p["D"] = jnp.ones((d_inner,), jnp.float32)
    p["w_out"] = 0.3 * jax.random.normal(ks[5], (d_model, d_inner), jnp.float32)
    p["w_proj"] = 0.3 * jax.random.normal(ks[6], (d_model, d_model), jnp.float32)
    p["b_proj"] = 0.1 * jax.random.normal(ks[7], (d_model,), jnp.float32)
    return p


# ------------------------- pure-JAX reference (same math, unfused) -------------------------
def reference_forward(x, params):
    B, d_model, L = x.shape
    xt = jnp.transpose(x, (0, 2, 1)).astype(jnp.float32)
    d_inner = params["D"].shape[0]
    d_state = params["A_log"].shape[1]
    dt_rank = params["w_dt"].shape[1]
    d_conv = params["w_conv"].shape[1]

    xz = xt @ params["w_in"].T
    x_pre, z = xz[..., :d_inner], xz[..., d_inner:]
    xp = jnp.pad(x_pre, ((0, 0), (d_conv - 1, 0), (0, 0)))
    xconv = sum(xp[:, k:k + L, :] * params["w_conv"][:, k][None, None, :]
                for k in range(d_conv)) + params["b_conv"][None, None, :]
    xs = _silu_ref(xconv)
    x_dbl = xs @ params["w_x"].T
    dt_in = x_dbl[..., :dt_rank]
    b_mat = x_dbl[..., dt_rank:dt_rank + d_state]
    c_mat = x_dbl[..., dt_rank + d_state:dt_rank + 2 * d_state]
    dt = _softplus(dt_in @ params["w_dt"].T + params["b_dt"])
    A = -jnp.exp(params["A_log"])                                    # (d_inner, d_state)

    def scan_one(xs_b, dt_b, b_b, c_b):
        def step(h, inp):
            xs_t, dt_t, b_t, c_t = inp
            dA = jnp.exp(dt_t[:, None] * A)
            h = dA * h + (dt_t * xs_t)[:, None] * b_t[None, :]
            y = (h * c_t[None, :]).sum(-1) + params["D"] * xs_t
            return h, y
        _, ys = jax.lax.scan(step, jnp.zeros((d_inner, d_state), jnp.float32),
                             (xs_b, dt_b, b_b, c_b))
        return ys

    y = jax.vmap(scan_one)(xs, dt, b_mat, c_mat)
    y = y * _silu_ref(z)
    out = y @ params["w_out"].T
    out = out @ params["w_proj"].T + params["b_proj"]
    return jnp.transpose(out, (0, 2, 1))


if __name__ == "__main__":
    d_model, d_state, d_conv, expand = 2, 16, 4, 2
    B, L = 2, 8
    key = jax.random.PRNGKey(0)
    kp, kx = jax.random.split(key)
    params = init_params(kp, d_model, d_state, d_conv, expand)
    x = jax.random.normal(kx, (B, d_model, L), jnp.float32)          # PyTorch NCL layout

    out = jax.block_until_ready(mamba_next_token(x, params))
    ref = jax.block_until_ready(reference_forward(x, params))

    assert out.shape == (B, d_model, L)
    np.testing.assert_allclose(np.asarray(out), np.asarray(ref), rtol=2e-3, atol=2e-3)
    print("KERNEL_OK")
</pallas_src>

<mosaic_0001>
module attributes {stable_mosaic.version = 11 : i64} {
  func.func @mamba_next_token_kernel(%arg0: i32, %arg1: memref<2x2x8xf32, #tpu.memory_space<vmem>>, %arg2: memref<2x8xf32, #tpu.memory_space<vmem>>, %arg3: memref<4x4xf32, #tpu.memory_space<vmem>>, %arg4: memref<1x4xf32, #tpu.memory_space<vmem>>, %arg5: memref<4x33xf32, #tpu.memory_space<vmem>>, %arg6: memref<1x4xf32, #tpu.memory_space<vmem>>, %arg7: memref<1x4xf32, #tpu.memory_space<vmem>>, %arg8: memref<16x4xf32, #tpu.memory_space<vmem>>, %arg9: memref<1x4xf32, #tpu.memory_space<vmem>>, %arg10: memref<4x2xf32, #tpu.memory_space<vmem>>, %arg11: memref<1x2xf32, #tpu.memory_space<vmem>>, %arg12: memref<2x2x8xf32, #tpu.memory_space<vmem>>, %arg13: memref<8x4xf32, #tpu.memory_space<vmem>>) attributes {dimension_semantics = [#tpu.dimension_semantics<arbitrary>], iteration_bounds = array<i64: 1>, scalar_prefetch = 0 : i64, scratch_operands = 1 : i64, tpu.core_type = #tpu.core_type<tc>, window_params = [{pipeline_mode = #tpu.pipeline_mode<synchronous>, transform_indices = @transform_0, window_bounds = array<i64: 2, 2, 8>}, {pipeline_mode = #tpu.pipeline_mode<synchronous>, transform_indices = @transform_1, window_bounds = array<i64: 2, 8>}, {pipeline_mode = #tpu.pipeline_mode<synchronous>, transform_indices = @transform_2, window_bounds = array<i64: 4, 4>}, {pipeline_mode = #tpu.pipeline_mode<synchronous>, transform_indices = @transform_3, window_bounds = array<i64: 1, 4>}, {pipeline_mode = #tpu.pipeline_mode<synchronous>, transform_indices = @transform_4, window_bounds = array<i64: 4, 33>}, {pipeline_mode = #tpu.pipeline_mode<synchronous>, transform_indices = @transform_5, window_bounds = array<i64: 1, 4>}, {pipeline_mode = #tpu.pipeline_mode<synchronous>, transform_indices = @transform_6, window_bounds = array<i64: 1, 4>}, {pipeline_mode = #tpu.pipeline_mode<synchronous>, transform_indices = @transform_7, window_bounds = array<i64: 16, 4>}, {pipeline_mode = #tpu.pipeline_mode<synchronous>, transform_indices = @transform_8, window_bounds = array<i64: 1, 4>}, {pipeline_mode = #tpu.pipeline_mode<synchronous>, transform_indices = @transform_9, window_bounds = array<i64: 4, 2>}, {pipeline_mode = #tpu.pipeline_mode<synchronous>, transform_indices = @transform_10, window_bounds = array<i64: 1, 2>}, {pipeline_mode = #tpu.pipeline_mode<synchronous>, transform_indices = @transform_11, window_bounds = array<i64: 2, 2, 8>}]} {
    %c0 = arith.constant 0 : index
    %c0_0 = arith.constant 0 : index
    %0 = vector.load %arg2[%c0, %c0_0] : memref<2x8xf32, #tpu.memory_space<vmem>>, vector<2x8xf32>
    %c0_1 = arith.constant 0 : index
    %c0_2 = arith.constant 0 : index
    %1 = vector.load %arg3[%c0_1, %c0_2] : memref<4x4xf32, #tpu.memory_space<vmem>>, vector<4x4xf32>
    %c0_3 = arith.constant 0 : index
    %c0_4 = arith.constant 0 : index
    %2 = vector.load %arg4[%c0_3, %c0_4] : memref<1x4xf32, #tpu.memory_space<vmem>>, vector<1x4xf32>
    %c0_5 = arith.constant 0 : index
    %c0_6 = arith.constant 0 : index
    %3 = vector.load %arg5[%c0_5, %c0_6] : memref<4x33xf32, #tpu.memory_space<vmem>>, vector<4x33xf32>
    %c0_7 = arith.constant 0 : index
    %c0_8 = arith.constant 0 : index
    %4 = vector.load %arg6[%c0_7, %c0_8] : memref<1x4xf32, #tpu.memory_space<vmem>>, vector<1x4xf32>
    %c0_9 = arith.constant 0 : index
    %c0_10 = arith.constant 0 : index
    %5 = vector.load %arg7[%c0_9, %c0_10] : memref<1x4xf32, #tpu.memory_space<vmem>>, vector<1x4xf32>
    %c0_11 = arith.constant 0 : index
    %c0_12 = arith.constant 0 : index
    %6 = vector.load %arg8[%c0_11, %c0_12] : memref<16x4xf32, #tpu.memory_space<vmem>>, vector<16x4xf32>
    %c0_13 = arith.constant 0 : index
    %c0_14 = arith.constant 0 : index
    %7 = vector.load %arg9[%c0_13, %c0_14] : memref<1x4xf32, #tpu.memory_space<vmem>>, vector<1x4xf32>
    %c0_15 = arith.constant 0 : index
    %c0_16 = arith.constant 0 : index
    %8 = vector.load %arg10[%c0_15, %c0_16] : memref<4x2xf32, #tpu.memory_space<vmem>>, vector<4x2xf32>
    %c0_17 = arith.constant 0 : index
    %c0_18 = arith.constant 0 : index
    %9 = vector.load %arg11[%c0_17, %c0_18] : memref<1x2xf32, #tpu.memory_space<vmem>>, vector<1x2xf32>
    %c0_19 = arith.constant 0 : index
    %c0_20 = arith.constant 0 : index
    %c0_21 = arith.constant 0 : index
    %10 = vector.load %arg1[%c0_19, %c0_20, %c0_21] : memref<2x2x8xf32, #tpu.memory_space<vmem>>, vector<1x2x8xf32>
    %11 = vector.shape_cast %10 : vector<1x2x8xf32> to vector<2x8xf32>
    %12 = tpu.transpose %11, [1, 0] : vector<2x8xf32> -> vector<8x2xf32>
    %13 = vector.extract_strided_slice %12 {offsets = [0, 0], sizes = [8, 1], strides = [1, 1]} : vector<8x2xf32> to vector<8x1xf32>
    %14 = vector.extract_strided_slice %0 {offsets = [0, 0], sizes = [1, 8], strides = [1, 1]} : vector<2x8xf32> to vector<1x8xf32>
    %15 = vector.broadcast %13 : vector<8x1xf32> to vector<8x8xf32>
    %16 = vector.broadcast %14 : vector<1x8xf32> to vector<8x8xf32>
    %17 = arith.mulf %15, %16 : vector<8x8xf32>
    %18 = vector.extract_strided_slice %12 {offsets = [0, 1], sizes = [8, 1], strides = [1, 1]} : vector<8x2xf32> to vector<8x1xf32>
    %19 = vector.extract_strided_slice %0 {offsets = [1, 0], sizes = [1, 8], strides = [1, 1]} : vector<2x8xf32> to vector<1x8xf32>
    %20 = vector.broadcast %18 : vector<8x1xf32> to vector<8x8xf32>
    %21 = vector.broadcast %19 : vector<1x8xf32> to vector<8x8xf32>
    %22 = arith.mulf %20, %21 : vector<8x8xf32>
    %23 = arith.addf %17, %22 : vector<8x8xf32>
    %24 = vector.extract_strided_slice %23 {offsets = [0, 0], sizes = [8, 4], strides = [1, 1]} : vector<8x8xf32> to vector<8x4xf32>
    %25 = vector.extract_strided_slice %23 {offsets = [0, 4], sizes = [8, 4], strides = [1, 1]} : vector<8x8xf32> to vector<8x4xf32>
    %cst = arith.constant 0.000000e+00 : f32
    %26 = vector.broadcast %cst : f32 to vector<3x4xf32>
    %27 = tpu.concatenate %26, %24 in 0 : vector<3x4xf32>, vector<8x4xf32> -> vector<11x4xf32>
    %28 = vector.extract_strided_slice %27 {offsets = [0, 0], sizes = [8, 4], strides = [1, 1]} : vector<11x4xf32> to vector<8x4xf32>
    %29 = vector.extract_strided_slice %1 {offsets = [0, 0], sizes = [1, 4], strides = [1, 1]} : vector<4x4xf32> to vector<1x4xf32>
    %30 = vector.broadcast %29 : vector<1x4xf32> to vector<8x4xf32>
    %31 = arith.mulf %28, %30 : vector<8x4xf32>
    %32 = vector.broadcast %2 : vector<1x4xf32> to vector<8x4xf32>
    %33 = arith.addf %32, %31 : vector<8x4xf32>
    %34 = vector.extract_strided_slice %27 {offsets = [1, 0], sizes = [8, 4], strides = [1, 1]} : vector<11x4xf32> to vector<8x4xf32>
    %35 = vector.extract_strided_slice %1 {offsets = [1, 0], sizes = [1, 4], strides = [1, 1]} : vector<4x4xf32> to vector<1x4xf32>
    %36 = vector.broadcast %35 : vector<1x4xf32> to vector<8x4xf32>
    %37 = arith.mulf %34, %36 : vector<8x4xf32>
    %38 = arith.addf %33, %37 : vector<8x4xf32>
    %39 = vector.extract_strided_slice %27 {offsets = [2, 0], sizes = [8, 4], strides = [1, 1]} : vector<11x4xf32> to vector<8x4xf32>
    %40 = vector.extract_strided_slice %1 {offsets = [2, 0], sizes = [1, 4], strides = [1, 1]} : vector<4x4xf32> to vector<1x4xf32>
    %41 = vector.broadcast %40 : vector<1x4xf32> to vector<8x4xf32>
    %42 = arith.mulf %39, %41 : vector<8x4xf32>
    %43 = arith.addf %38, %42 : vector<8x4xf32>
    %44 = vector.extract_strided_slice %27 {offsets = [3, 0], sizes = [8, 4], strides = [1, 1]} : vector<11x4xf32> to vector<8x4xf32>
    %45 = vector.extract_strided_slice %1 {offsets = [3, 0], sizes = [1, 4], strides = [1, 1]} : vector<4x4xf32> to vector<1x4xf32>
    %46 = vector.broadcast %45 : vector<1x4xf32> to vector<8x4xf32>
    %47 = arith.mulf %44, %46 : vector<8x4xf32>
    %48 = arith.addf %43, %47 : vector<8x4xf32>
    %cst_22 = arith.constant 0.000000e+00 : f32
    %49 = vector.broadcast %cst_22 : f32 to vector<8x4xf32>
    %50 = arith.subf %49, %48 : vector<8x4xf32>
    %51 = math.exp %50 : vector<8x4xf32>
    %cst_23 = arith.constant 1.000000e+00 : f32
    %52 = vector.broadcast %cst_23 : f32 to vector<8x4xf32>
    %53 = arith.addf %52, %51 : vector<8x4xf32>
    %54 = tpu.reciprocal %53 : vector<8x4xf32> -> vector<8x4xf32>
    %55 = arith.mulf %48, %54 : vector<8x4xf32>
    %56 = vector.extract_strided_slice %55 {offsets = [0, 0], sizes = [8, 1], strides = [1, 1]} : vector<8x4xf32> to vector<8x1xf32>
    %57 = vector.extract_strided_slice %3 {offsets = [0, 0], sizes = [1, 33], strides = [1, 1]} : vector<4x33xf32> to vector<1x33xf32>
    %58 = vector.broadcast %56 : vector<8x1xf32> to vector<8x33xf32>
    %59 = vector.broadcast %57 : vector<1x33xf32> to vector<8x33xf32>
    %60 = arith.mulf %58, %59 : vector<8x33xf32>
    %61 = vector.extract_strided_slice %55 {offsets = [0, 1], sizes = [8, 1], strides = [1, 1]} : vector<8x4xf32> to vector<8x1xf32>
    %62 = vector.extract_strided_slice %3 {offsets = [1, 0], sizes = [1, 33], strides = [1, 1]} : vector<4x33xf32> to vector<1x33xf32>
    %63 = vector.broadcast %61 : vector<8x1xf32> to vector<8x33xf32>
    %64 = vector.broadcast %62 : vector<1x33xf32> to vector<8x33xf32>
    %65 = arith.mulf %63, %64 : vector<8x33xf32>
    %66 = arith.addf %60, %65 : vector<8x33xf32>
    %67 = vector.extract_strided_slice %55 {offsets = [0, 2], sizes = [8, 1], strides = [1, 1]} : vector<8x4xf32> to vector<8x1xf32>
    %68 = vector.extract_strided_slice %3 {offsets = [2, 0], sizes = [1, 33], strides = [1, 1]} : vector<4x33xf32> to vector<1x33xf32>
    %69 = vector.broadcast %67 : vector<8x1xf32> to vector<8x33xf32>
    %70 = vector.broadcast %68 : vector<1x33xf32> to vector<8x33xf32>
    %71 = arith.mulf %69, %70 : vector<8x33xf32>
    %72 = arith.addf %66, %71 : vector<8x33xf32>
    %73 = vector.extract_strided_slice %55 {offsets = [0, 3], sizes = [8, 1], strides = [1, 1]} : vector<8x4xf32> to vector<8x1xf32>
    %74 = vector.extract_strided_slice %3 {offsets = [3, 0], sizes = [1, 33], strides = [1, 1]} : vector<4x33xf32> to vector<1x33xf32>
    %75 = vector.broadcast %73 : vector<8x1xf32> to vector<8x33xf32>
    %76 = vector.broadcast %74 : vector<1x33xf32> to vector<8x33xf32>
    %77 = arith.mulf %75, %76 : vector<8x33xf32>
    %78 = arith.addf %72, %77 : vector<8x33xf32>
    %79 = vector.extract_strided_slice %78 {offsets = [0, 0], sizes = [8, 1], strides = [1, 1]} : vector<8x33xf32> to vector<8x1xf32>
    %80 = vector.extract_strided_slice %78 {offsets = [0, 1], sizes = [8, 16], strides = [1, 1]} : vector<8x33xf32> to vector<8x16xf32>
    %81 = vector.extract_strided_slice %78 {offsets = [0, 17], sizes = [8, 16], strides = [1, 1]} : vector<8x33xf32> to vector<8x16xf32>
    %82 = vector.broadcast %79 : vector<8x1xf32> to vector<8x4xf32>
    %83 = vector.broadcast %4 : vector<1x4xf32> to vector<8x4xf32>
    %84 = arith.mulf %82, %83 : vector<8x4xf32>
    %85 = vector.broadcast %5 : vector<1x4xf32> to vector<8x4xf32>
    %86 = arith.addf %84, %85 : vector<8x4xf32>
    %cst_24 = arith.constant 0.000000e+00 : f32
    %87 = vector.broadcast %cst_24 : f32 to vector<8x4xf32>
    %88 = arith.maximumf %86, %87 : vector<8x4xf32>
    %89 = math.absf %86 : vector<8x4xf32>
    %cst_25 = arith.constant 0.000000e+00 : f32
    %90 = vector.broadcast %cst_25 : f32 to vector<8x4xf32>
    %91 = arith.subf %90, %89 : vector<8x4xf32>
    %92 = math.exp %91 : vector<8x4xf32>
    %cst_26 = arith.constant 1.000000e+00 : f32
    %93 = vector.broadcast %cst_26 : f32 to vector<8x4xf32>
    %94 = arith.addf %93, %92 : vector<8x4xf32>
    %95 = math.log %94 : vector<8x4xf32>
    %96 = arith.addf %88, %95 : vector<8x4xf32>
    %97 = arith.mulf %96, %55 : vector<8x4xf32>
    %98 = vector.broadcast %7 : vector<1x4xf32> to vector<8x4xf32>
    %99 = arith.mulf %55, %98 : vector<8x4xf32>
    %100 = tpu.transpose %80, [1, 0] : vector<8x16xf32> -> vector<16x8xf32>
    %101 = tpu.transpose %81, [1, 0] : vector<8x16xf32> -> vector<16x8xf32>
    %102 = vector.extract_strided_slice %96 {offsets = [0, 0], sizes = [1, 4], strides = [1, 1]} : vector<8x4xf32> to vector<1x4xf32>
    %103 = vector.broadcast %102 : vector<1x4xf32> to vector<16x4xf32>
    %104 = arith.mulf %103, %6 : vector<16x4xf32>
    %105 = math.exp %104 : vector<16x4xf32>
    %106 = vector.extract_strided_slice %96 {offsets = [1, 0], sizes = [1, 4], strides = [1, 1]} : vector<8x4xf32> to vector<1x4xf32>
    %107 = vector.broadcast %106 : vector<1x4xf32> to vector<16x4xf32>
    %108 = arith.mulf %107, %6 : vector<16x4xf32>
    %109 = math.exp %108 : vector<16x4xf32>
    %110 = vector.extract_strided_slice %96 {offsets = [2, 0], sizes = [1, 4], strides = [1, 1]} : vector<8x4xf32> to vector<1x4xf32>
    %111 = vector.broadcast %110 : vector<1x4xf32> to vector<16x4xf32>
    %112 = arith.mulf %111, %6 : vector<16x4xf32>
    %113 = math.exp %112 : vector<16x4xf32>
    %114 = vector.extract_strided_slice %96 {offsets = [3, 0], sizes = [1, 4], strides = [1, 1]} : vector<8x4xf32> to vector<1x4xf32>
    %115 = vector.broadcast %114 : vector<1x4xf32> to vector<16x4xf32>
    %116 = arith.mulf %115, %6 : vector<16x4xf32>
    %117 = math.exp %116 : vector<16x4xf32>
    %118 = vector.extract_strided_slice %96 {offsets = [4, 0], sizes = [1, 4], strides = [1, 1]} : vector<8x4xf32> to vector<1x4xf32>
    %119 = vector.broadcast %118 : vector<1x4xf32> to vector<16x4xf32>
    %120 = arith.mulf %119, %6 : vector<16x4xf32>
    %121 = math.exp %120 : vector<16x4xf32>
    %122 = vector.extract_strided_slice %96 {offsets = [5, 0], sizes = [1, 4], strides = [1, 1]} : vector<8x4xf32> to vector<1x4xf32>
    %123 = vector.broadcast %122 : vector<1x4xf32> to vector<16x4xf32>
    %124 = arith.mulf %123, %6 : vector<16x4xf32>
    %125 = math.exp %124 : vector<16x4xf32>
    %126 = vector.extract_strided_slice %96 {offsets = [6, 0], sizes = [1, 4], strides = [1, 1]} : vector<8x4xf32> to vector<1x4xf32>
    %127 = vector.broadcast %126 : vector<1x4xf32> to vector<16x4xf32>
    %128 = arith.mulf %127, %6 : vector<16x4xf32>
    %129 = math.exp %128 : vector<16x4xf32>
    %130 = vector.extract_strided_slice %96 {offsets = [7, 0], sizes = [1, 4], strides = [1, 1]} : vector<8x4xf32> to vector<1x4xf32>
    %131 = vector.broadcast %130 : vector<1x4xf32> to vector<16x4xf32>
    %132 = arith.mulf %131, %6 : vector<16x4xf32>
    %133 = math.exp %132 : vector<16x4xf32>
    %134 = vector.extract_strided_slice %100 {offsets = [0, 0], sizes = [16, 1], strides = [1, 1]} : vector<16x8xf32> to vector<16x1xf32>
    %135 = vector.extract_strided_slice %97 {offsets = [0, 0], sizes = [1, 4], strides = [1, 1]} : vector<8x4xf32> to vector<1x4xf32>
    %136 = vector.broadcast %134 : vector<16x1xf32> to vector<16x4xf32>
    %137 = vector.broadcast %135 : vector<1x4xf32> to vector<16x4xf32>
    %138 = arith.mulf %136, %137 : vector<16x4xf32>
    %139 = vector.extract_strided_slice %100 {offsets = [0, 1], sizes = [16, 1], strides = [1, 1]} : vector<16x8xf32> to vector<16x1xf32>
    %140 = vector.extract_strided_slice %97 {offsets = [1, 0], sizes = [1, 4], strides = [1, 1]} : vector<8x4xf32> to vector<1x4xf32>
    %141 = vector.broadcast %139 : vector<16x1xf32> to vector<16x4xf32>
    %142 = vector.broadcast %140 : vector<1x4xf32> to vector<16x4xf32>
    %143 = arith.mulf %141, %142 : vector<16x4xf32>
    %144 = vector.extract_strided_slice %100 {offsets = [0, 2], sizes = [16, 1], strides = [1, 1]} : vector<16x8xf32> to vector<16x1xf32>
    %145 = vector.extract_strided_slice %97 {offsets = [2, 0], sizes = [1, 4], strides = [1, 1]} : vector<8x4xf32> to vector<1x4xf32>
    %146 = vector.broadcast %144 : vector<16x1xf32> to vector<16x4xf32>
    %147 = vector.broadcast %145 : vector<1x4xf32> to vector<16x4xf32>
    %148 = arith.mulf %146, %147 : vector<16x4xf32>
    %149 = vector.extract_strided_slice %100 {offsets = [0, 3], sizes = [16, 1], strides = [1, 1]} : vector<16x8xf32> to vector<16x1xf32>
    %150 = vector.extract_strided_slice %97 {offsets = [3, 0], sizes = [1, 4], strides = [1, 1]} : vector<8x4xf32> to vector<1x4xf32>
    %151 = vector.broadcast %149 : vector<16x1xf32> to vector<16x4xf32>
    %152 = vector.broadcast %150 : vector<1x4xf32> to vector<16x4xf32>
    %153 = arith.mulf %151, %152 : vector<16x4xf32>
    %154 = vector.extract_strided_slice %100 {offsets = [0, 4], sizes = [16, 1], strides = [1, 1]} : vector<16x8xf32> to vector<16x1xf32>
    %155 = vector.extract_strided_slice %97 {offsets = [4, 0], sizes = [1, 4], strides = [1, 1]} : vector<8x4xf32> to vector<1x4xf32>
    %156 = vector.broadcast %154 : vector<16x1xf32> to vector<16x4xf32>
    %157 = vector.broadcast %155 : vector<1x4xf32> to vector<16x4xf32>
    %158 = arith.mulf %156, %157 : vector<16x4xf32>
    %159 = vector.extract_strided_slice %100 {offsets = [0, 5], sizes = [16, 1], strides = [1, 1]} : vector<16x8xf32> to vector<16x1xf32>
    %160 = vector.extract_strided_slice %97 {offsets = [5, 0], sizes = [1, 4], strides = [1, 1]} : vector<8x4xf32> to vector<1x4xf32>
    %161 = vector.broadcast %159 : vector<16x1xf32> to vector<16x4xf32>
    %162 = vector.broadcast %160 : vector<1x4xf32> to vector<16x4xf32>
    %163 = arith.mulf %161, %162 : vector<16x4xf32>
    %164 = vector.extract_strided_slice %100 {offsets = [0, 6], sizes = [16, 1], strides = [1, 1]} : vector<16x8xf32> to vector<16x1xf32>
    %165 = vector.extract_strided_slice %97 {offsets = [6, 0], sizes = [1, 4], strides = [1, 1]} : vector<8x4xf32> to vector<1x4xf32>
    %166 = vector.broadcast %164 : vector<16x1xf32> to vector<16x4xf32>
    %167 = vector.broadcast %165 : vector<1x4xf32> to vector<16x4xf32>
    %168 = arith.mulf %166, %167 : vector<16x4xf32>
    %169 = vector.extract_strided_slice %100 {offsets = [0, 7], sizes = [16, 1], strides = [1, 1]} : vector<16x8xf32> to vector<16x1xf32>
    %170 = vector.extract_strided_slice %97 {offsets = [7, 0], sizes = [1, 4], strides = [1, 1]} : vector<8x4xf32> to vector<1x4xf32>
    %171 = vector.broadcast %169 : vector<16x1xf32> to vector<16x4xf32>
    %172 = vector.broadcast %170 : vector<1x4xf32> to vector<16x4xf32>
    %173 = arith.mulf %171, %172 : vector<16x4xf32>
    %cst_27 = arith.constant 0.000000e+00 : f32
    %174 = vector.broadcast %cst_27 : f32 to vector<16x4xf32>
    %175 = arith.mulf %105, %174 : vector<16x4xf32>
    %176 = arith.addf %175, %138 : vector<16x4xf32>
    %177 = vector.extract_strided_slice %101 {offsets = [0, 0], sizes = [16, 1], strides = [1, 1]} : vector<16x8xf32> to vector<16x1xf32>
    %178 = vector.broadcast %177 : vector<16x1xf32> to vector<16x4xf32>
    %179 = arith.mulf %178, %176 : vector<16x4xf32>
    %cst_28 = arith.constant dense<0.000000e+00> : vector<4xf32>
    %180 = vector.multi_reduction <add>, %179, %cst_28 [0] : vector<16x4xf32> to vector<4xf32>
    %181 = vector.shape_cast %180 : vector<4xf32> to vector<1x4xf32>
    %c0_29 = arith.constant 0 : index
    %c0_30 = arith.constant 0 : index
    %182 = vector.load %arg13[%c0_29, %c0_30] : memref<8x4xf32, #tpu.memory_space<vmem>>, vector<1x4xf32>
    tpu.vector_store %arg13[%c0_29, %c0_30], %181 {strides = array<i32>} : memref<8x4xf32, #tpu.memory_space<vmem>>, vector<1x4xf32>,
    %183 = arith.mulf %109, %176 : vector<16x4xf32>
    %184 = arith.addf %183, %143 : vector<16x4xf32>
    %185 = vector.extract_strided_slice %101 {offsets = [0, 1], sizes = [16, 1], strides = [1, 1]} : vector<16x8xf32> to vector<16x1xf32>
    %186 = vector.broadcast %185 : vector<16x1xf32> to vector<16x4xf32>
    %187 = arith.mulf %186, %184 : vector<16x4xf32>
    %cst_31 = arith.constant dense<0.000000e+00> : vector<4xf32>
    %188 = vector.multi_reduction <add>, %187, %cst_31 [0] : vector<16x4xf32> to vector<4xf32>
    %189 = vector.shape_cast %188 : vector<4xf32> to vector<1x4xf32>
    %c1 = arith.constant 1 : index
    %c0_32 = arith.constant 0 : index
    %190 = vector.load %arg13[%c1, %c0_32] : memref<8x4xf32, #tpu.memory_space<vmem>>, vector<1x4xf32>
    tpu.vector_store %arg13[%c1, %c0_32], %189 {strides = array<i32>} : memref<8x4xf32, #tpu.memory_space<vmem>>, vector<1x4xf32>,
    %191 = arith.mulf %113, %184 : vector<16x4xf32>
    %192 = arith.addf %191, %148 : vector<16x4xf32>
    %193 = vector.extract_strided_slice %101 {offsets = [0, 2], sizes = [16, 1], strides = [1, 1]} : vector<16x8xf32> to vector<16x1xf32>
    %194 = vector.broadcast %193 : vector<16x1xf32> to vector<16x4xf32>
    %195 = arith.mulf %194, %192 : vector<16x4xf32>
    %cst_33 = arith.constant dense<0.000000e+00> : vector<4xf32>
    %196 = vector.multi_reduction <add>, %195, %cst_33 [0] : vector<16x4xf32> to vector<4xf32>
    %197 = vector.shape_cast %196 : vector<4xf32> to vector<1x4xf32>
    %c2 = arith.constant 2 : index
    %c0_34 = arith.constant 0 : index
    %198 = vector.load %arg13[%c2, %c0_34] : memref<8x4xf32, #tpu.memory_space<vmem>>, vector<1x4xf32>
    tpu.vector_store %arg13[%c2, %c0_34], %197 {strides = array<i32>} : memref<8x4xf32, #tpu.memory_space<vmem>>, vector<1x4xf32>,
    %199 = arith.mulf %117, %192 : vector<16x4xf32>
    %200 = arith.addf %199, %153 : vector<16x4xf32>
    %201 = vector.extract_strided_slice %101 {offsets = [0, 3], sizes = [16, 1], strides = [1, 1]} : vector<16x8xf32> to vector<16x1xf32>
    %202 = vector.broadcast %201 : vector<16x1xf32> to vector<16x4xf32>
    %203 = arith.mulf %202, %200 : vector<16x4xf32>
    %cst_35 = arith.constant dense<0.000000e+00> : vector<4xf32>
    %204 = vector.multi_reduction <add>, %203, %cst_35 [0] : vector<16x4xf32> to vector<4xf32>
    %205 = vector.shape_cast %204 : vector<4xf32> to vector<1x4xf32>
    %c3 = arith.constant 3 : index
    %c0_36 = arith.constant 0 : index
    %206 = vector.load %arg13[%c3, %c0_36] : memref<8x4xf32, #tpu.memory_space<vmem>>, vector<1x4xf32>
    tpu.vector_store %arg13[%c3, %c0_36], %205 {strides = array<i32>} : memref<8x4xf32, #tpu.memory_space<vmem>>, vector<1x4xf32>,
    %207 = arith.mulf %121, %200 : vector<16x4xf32>
    %208 = arith.addf %207, %158 : vector<16x4xf32>
    %209 = vector.extract_strided_slice %101 {offsets = [0, 4], sizes = [16, 1], strides = [1, 1]} : vector<16x8xf32> to vector<16x1xf32>
    %210 = vector.broadcast %209 : vector<16x1xf32> to vector<16x4xf32>
    %211 = arith.mulf %210, %208 : vector<16x4xf32>
    %cst_37 = arith.constant dense<0.000000e+00> : vector<4xf32>
    %212 = vector.multi_reduction <add>, %211, %cst_37 [0] : vector<16x4xf32> to vector<4xf32>
    %213 = vector.shape_cast %212 : vector<4xf32> to vector<1x4xf32>
    %c4 = arith.constant 4 : index
    %c0_38 = arith.constant 0 : index
    %214 = vector.load %arg13[%c4, %c0_38] : memref<8x4xf32, #tpu.memory_space<vmem>>, vector<1x4xf32>
    tpu.vector_store %arg13[%c4, %c0_38], %213 {strides = array<i32>} : memref<8x4xf32, #tpu.memory_space<vmem>>, vector<1x4xf32>,
    %215 = arith.mulf %125, %208 : vector<16x4xf32>
    %216 = arith.addf %215, %163 : vector<16x4xf32>
    %217 = vector.extract_strided_slice %101 {offsets = [0, 5], sizes = [16, 1], strides = [1, 1]} : vector<16x8xf32> to vector<16x1xf32>
    %218 = vector.broadcast %217 : vector<16x1xf32> to vector<16x4xf32>
    %219 = arith.mulf %218, %216 : vector<16x4xf32>
    %cst_39 = arith.constant dense<0.000000e+00> : vector<4xf32>
    %220 = vector.multi_reduction <add>, %219, %cst_39 [0] : vector<16x4xf32> to vector<4xf32>
    %221 = vector.shape_cast %220 : vector<4xf32> to vector<1x4xf32>
    %c5 = arith.constant 5 : index
    %c0_40 = arith.constant 0 : index
    %222 = vector.load %arg13[%c5, %c0_40] : memref<8x4xf32, #tpu.memory_space<vmem>>, vector<1x4xf32>
    tpu.vector_store %arg13[%c5, %c0_40], %221 {strides = array<i32>} : memref<8x4xf32, #tpu.memory_space<vmem>>, vector<1x4xf32>,
    %223 = arith.mulf %129, %216 : vector<16x4xf32>
    %224 = arith.addf %223, %168 : vector<16x4xf32>
    %225 = vector.extract_strided_slice %101 {offsets = [0, 6], sizes = [16, 1], strides = [1, 1]} : vector<16x8xf32> to vector<16x1xf32>
    %226 = vector.broadcast %225 : vector<16x1xf32> to vector<16x4xf32>
    %227 = arith.mulf %226, %224 : vector<16x4xf32>
    %cst_41 = arith.constant dense<0.000000e+00> : vector<4xf32>
    %228 = vector.multi_reduction <add>, %227, %cst_41 [0] : vector<16x4xf32> to vector<4xf32>
    %229 = vector.shape_cast %228 : vector<4xf32> to vector<1x4xf32>
    %c6 = arith.constant 6 : index
    %c0_42 = arith.constant 0 : index
    %230 = vector.load %arg13[%c6, %c0_42] : memref<8x4xf32, #tpu.memory_space<vmem>>, vector<1x4xf32>
    tpu.vector_store %arg13[%c6, %c0_42], %229 {strides = array<i32>} : memref<8x4xf32, #tpu.memory_space<vmem>>, vector<1x4xf32>,
    %231 = arith.mulf %133, %224 : vector<16x4xf32>
    %232 = arith.addf %231, %173 : vector<16x4xf32>
    %233 = vector.extract_strided_slice %101 {offsets = [0, 7], sizes = [16, 1], strides = [1, 1]} : vector<16x8xf32> to vector<16x1xf32>
    %234 = vector.broadcast %233 : vector<16x1xf32> to vector<16x4xf32>
    %235 = arith.mulf %234, %232 : vector<16x4xf32>
    %cst_43 = arith.constant dense<0.000000e+00> : vector<4xf32>
    %236 = vector.multi_reduction <add>, %235, %cst_43 [0] : vector<16x4xf32> to vector<4xf32>
    %237 = vector.shape_cast %236 : vector<4xf32> to vector<1x4xf32>
    %c7 = arith.constant 7 : index
    %c0_44 = arith.constant 0 : index
    %238 = vector.load %arg13[%c7, %c0_44] : memref<8x4xf32, #tpu.memory_space<vmem>>, vector<1x4xf32>
    tpu.vector_store %arg13[%c7, %c0_44], %237 {strides = array<i32>} : memref<8x4xf32, #tpu.memory_space<vmem>>, vector<1x4xf32>,
    %c0_45 = arith.constant 0 : index
    %c0_46 = arith.constant 0 : index
    %239 = vector.load %arg13[%c0_45, %c0_46] : memref<8x4xf32, #tpu.memory_space<vmem>>, vector<8x4xf32>
    %240 = arith.addf %239, %99 : vector<8x4xf32>
    %cst_47 = arith.constant 0.000000e+00 : f32
    %241 = vector.broadcast %cst_47 : f32 to vector<8x4xf32>
    %242 = arith.subf %241, %25 : vector<8x4xf32>
    %243 = math.exp %242 : vector<8x4xf32>
    %cst_48 = arith.constant 1.000000e+00 : f32
    %244 = vector.broadcast %cst_48 : f32 to vector<8x4xf32>
    %245 = arith.addf %244, %243 : vector<8x4xf32>
    %246 = tpu.reciprocal %245 : vector<8x4xf32> -> vector<8x4xf32>
    %247 = arith.mulf %25, %246 : vector<8x4xf32>
    %248 = arith.mulf %240, %247 : vector<8x4xf32>
    %249 = vector.extract_strided_slice %248 {offsets = [0, 0], sizes = [8, 1], strides = [1, 1]} : vector<8x4xf32> to vector<8x1xf32>
    %250 = vector.extract_strided_slice %8 {offsets = [0, 0], sizes = [1, 2], strides = [1, 1]} : vector<4x2xf32> to vector<1x2xf32>
    %251 = vector.broadcast %249 : vector<8x1xf32> to vector<8x2xf32>
    %252 = vector.broadcast %250 : vector<1x2xf32> to vector<8x2xf32>
    %253 = arith.mulf %251, %252 : vector<8x2xf32>
    %254 = vector.extract_strided_slice %248 {offsets = [0, 1], sizes = [8, 1], strides = [1, 1]} : vector<8x4xf32> to vector<8x1xf32>
    %255 = vector.extract_strided_slice %8 {offsets = [1, 0], sizes = [1, 2], strides = [1, 1]} : vector<4x2xf32> to vector<1x2xf32>
    %256 = vector.broadcast %254 : vector<8x1xf32> to vector<8x2xf32>
    %257 = vector.broadcast %255 : vector<1x2xf32> to vector<8x2xf32>
    %258 = arith.mulf %256, %257 : vector<8x2xf32>
    %259 = arith.addf %253, %258 : vector<8x2xf32>
    %260 = vector.extract_strided_slice %248 {offsets = [0, 2], sizes = [8, 1], strides = [1, 1]} : vector<8x4xf32> to vector<8x1xf32>
    %261 = vector.extract_strided_slice %8 {offsets = [2, 0], sizes = [1, 2], strides = [1, 1]} : vector<4x2xf32> to vector<1x2xf32>
    %262 = vector.broadcast %260 : vector<8x1xf32> to vector<8x2xf32>
    %263 = vector.broadcast %261 : vector<1x2xf32> to vector<8x2xf32>
    %264 = arith.mulf %262, %263 : vector<8x2xf32>
    %265 = arith.addf %259, %264 : vector<8x2xf32>
    %266 = vector.extract_strided_slice %248 {offsets = [0, 3], sizes = [8, 1], strides = [1, 1]} : vector<8x4xf32> to vector<8x1xf32>
    %267 = vector.extract_strided_slice %8 {offsets = [3, 0], sizes = [1, 2], strides = [1, 1]} : vector<4x2xf32> to vector<1x2xf32>
    %268 = vector.broadcast %266 : vector<8x1xf32> to vector<8x2xf32>
    %269 = vector.broadcast %267 : vector<1x2xf32> to vector<8x2xf32>
    %270 = arith.mulf %268, %269 : vector<8x2xf32>
    %271 = arith.addf %265, %270 : vector<8x2xf32>
    %272 = vector.broadcast %9 : vector<1x2xf32> to vector<8x2xf32>
    %273 = arith.addf %271, %272 : vector<8x2xf32>
    %274 = tpu.transpose %273, [1, 0] : vector<8x2xf32> -> vector<2x8xf32>
    %c0_49 = arith.constant 0 : index
    %c0_50 = arith.constant 0 : index
    %c0_51 = arith.constant 0 : index
    %275 = vector.load %arg12[%c0_49, %c0_50, %c0_51] : memref<2x2x8xf32, #tpu.memory_space<vmem>>, vector<1x2x8xf32>
    %276 = vector.shape_cast %275 : vector<1x2x8xf32> to vector<2x8xf32>
    %277 = vector.shape_cast %274 : vector<2x8xf32> to vector<1x2x8xf32>
    tpu.vector_store %arg12[%c0_49, %c0_50, %c0_51], %277 {strides = array<i32>} : memref<2x2x8xf32, #tpu.memory_space<vmem>>, vector<1x2x8xf32>,
    %c1_52 = arith.constant 1 : index
    %c0_53 = arith.constant 0 : index
    %c0_54 = arith.constant 0 : index
    %278 = vector.load %arg1[%c1_52, %c0_53, %c0_54] : memref<2x2x8xf32, #tpu.memory_space<vmem>>, vector<1x2x8xf32>
    %279 = vector.shape_cast %278 : vector<1x2x8xf32> to vector<2x8xf32>
    %280 = tpu.transpose %279, [1, 0] : vector<2x8xf32> -> vector<8x2xf32>
    %281 = vector.extract_strided_slice %280 {offsets = [0, 0], sizes = [8, 1], strides = [1, 1]} : vector<8x2xf32> to vector<8x1xf32>
    %282 = vector.extract_strided_slice %0 {offsets = [0, 0], sizes = [1, 8], strides = [1, 1]} : vector<2x8xf32> to vector<1x8xf32>
    %283 = vector.broadcast %281 : vector<8x1xf32> to vector<8x8xf32>
    %284 = vector.broadcast %282 : vector<1x8xf32> to vector<8x8xf32>
    %285 = arith.mulf %283, %284 : vector<8x8xf32>
    %286 = vector.extract_strided_slice %280 {offsets = [0, 1], sizes = [8, 1], strides = [1, 1]} : vector<8x2xf32> to vector<8x1xf32>
    %287 = vector.extract_strided_slice %0 {offsets = [1, 0], sizes = [1, 8], strides = [1, 1]} : vector<2x8xf32> to vector<1x8xf32>
    %288 = vector.broadcast %286 : vector<8x1xf32> to vector<8x8xf32>
    %289 = vector.broadcast %287 : vector<1x8xf32> to vector<8x8xf32>
    %290 = arith.mulf %288, %289 : vector<8x8xf32>
    %291 = arith.addf %285, %290 : vector<8x8xf32>
    %292 = vector.extract_strided_slice %291 {offsets = [0, 0], sizes = [8, 4], strides = [1, 1]} : vector<8x8xf32> to vector<8x4xf32>
    %293 = vector.extract_strided_slice %291 {offsets = [0, 4], sizes = [8, 4], strides = [1, 1]} : vector<8x8xf32> to vector<8x4xf32>
    %cst_55 = arith.constant 0.000000e+00 : f32
    %294 = vector.broadcast %cst_55 : f32 to vector<3x4xf32>
    %295 = tpu.concatenate %294, %292 in 0 : vector<3x4xf32>, vector<8x4xf32> -> vector<11x4xf32>
    %296 = vector.extract_strided_slice %295 {offsets = [0, 0], sizes = [8, 4], strides = [1, 1]} : vector<11x4xf32> to vector<8x4xf32>
    %297 = vector.extract_strided_slice %1 {offsets = [0, 0], sizes = [1, 4], strides = [1, 1]} : vector<4x4xf32> to vector<1x4xf32>
    %298 = vector.broadcast %297 : vector<1x4xf32> to vector<8x4xf32>
    %299 = arith.mulf %296, %298 : vector<8x4xf32>
    %300 = vector.broadcast %2 : vector<1x4xf32> to vector<8x4xf32>
    %301 = arith.addf %300, %299 : vector<8x4xf32>
    %302 = vector.extract_strided_slice %295 {offsets = [1, 0], sizes = [8, 4], strides = [1, 1]} : vector<11x4xf32> to vector<8x4xf32>
    %303 = vector.extract_strided_slice %1 {offsets = [1, 0], sizes = [1, 4], strides = [1, 1]} : vector<4x4xf32> to vector<1x4xf32>
    %304 = vector.broadcast %303 : vector<1x4xf32> to vector<8x4xf32>
    %305 = arith.mulf %302, %304 : vector<8x4xf32>
    %306 = arith.addf %301, %305 : vector<8x4xf32>
    %307 = vector.extract_strided_slice %295 {offsets = [2, 0], sizes = [8, 4], strides = [1, 1]} : vector<11x4xf32> to vector<8x4xf32>
    %308 = vector.extract_strided_slice %1 {offsets = [2, 0], sizes = [1, 4], strides = [1, 1]} : vector<4x4xf32> to vector<1x4xf32>
    %309 = vector.broadcast %308 : vector<1x4xf32> to vector<8x4xf32>
    %310 = arith.mulf %307, %309 : vector<8x4xf32>
    %311 = arith.addf %306, %310 : vector<8x4xf32>
    %312 = vector.extract_strided_slice %295 {offsets = [3, 0], sizes = [8, 4], strides = [1, 1]} : vector<11x4xf32> to vector<8x4xf32>
    %313 = vector.extract_strided_slice %1 {offsets = [3, 0], sizes = [1, 4], strides = [1, 1]} : vector<4x4xf32> to vector<1x4xf32>
    %314 = vector.broadcast %313 : vector<1x4xf32> to vector<8x4xf32>
    %315 = arith.mulf %312, %314 : vector<8x4xf32>
    %316 = arith.addf %311, %315 : vector<8x4xf32>
    %cst_56 = arith.constant 0.000000e+00 : f32
    %317 = vector.broadcast %cst_56 : f32 to vector<8x4xf32>
    %318 = arith.subf %317, %316 : vector<8x4xf32>
    %319 = math.exp %318 : vector<8x4xf32>
    %cst_57 = arith.constant 1.000000e+00 : f32
    %320 = vector.broadcast %cst_57 : f32 to vector<8x4xf32>
    %321 = arith.addf %320, %319 : vector<8x4xf32>
    %322 = tpu.reciprocal %321 : vector<8x4xf32> -> vector<8x4xf32>
    %323 = arith.mulf %316, %322 : vector<8x4xf32>
    %324 = vector.extract_strided_slice %323 {offsets = [0, 0], sizes = [8, 1], strides = [1, 1]} : vector<8x4xf32> to vector<8x1xf32>
    %325 = vector.extract_strided_slice %3 {offsets = [0, 0], sizes = [1, 33], strides = [1, 1]} : vector<4x33xf32> to vector<1x33xf32>
    %326 = vector.broadcast %324 : vector<8x1xf32> to vector<8x33xf32>
    %327 = vector.broadcast %325 : vector<1x33xf32> to vector<8x33xf32>
    %328 = arith.mulf %326, %327 : vector<8x33xf32>
    %329 = vector.extract_strided_slice %323 {offsets = [0, 1], sizes = [8, 1], strides = [1, 1]} : vector<8x4xf32> to vector<8x1xf32>
    %330 = vector.extract_strided_slice %3 {offsets = [1, 0], sizes = [1, 33], strides = [1, 1]} : vector<4x33xf32> to vector<1x33xf32>
    %331 = vector.broadcast %329 : vector<8x1xf32> to vector<8x33xf32>
    %332 = vector.broadcast %330 : vector<1x33xf32> to vector<8x33xf32>
    %333 = arith.mulf %331, %332 : vector<8x33xf32>
    %334 = arith.addf %328, %333 : vector<8x33xf32>
    %335 = vector.extract_strided_slice %323 {offsets = [0, 2], sizes = [8, 1], strides = [1, 1]} : vector<8x4xf32> to vector<8x1xf32>
    %336 = vector.extract_strided_slice %3 {offsets = [2, 0], sizes = [1, 33], strides = [1, 1]} : vector<4x33xf32> to vector<1x33xf32>
    %337 = vector.broadcast %335 : vector<8x1xf32> to vector<8x33xf32>
    %338 = vector.broadcast %336 : vector<1x33xf32> to vector<8x33xf32>
    %339 = arith.mulf %337, %338 : vector<8x33xf32>
    %340 = arith.addf %334, %339 : vector<8x33xf32>
    %341 = vector.extract_strided_slice %323 {offsets = [0, 3], sizes = [8, 1], strides = [1, 1]} : vector<8x4xf32> to vector<8x1xf32>
    %342 = vector.extract_strided_slice %3 {offsets = [3, 0], sizes = [1, 33], strides = [1, 1]} : vector<4x33xf32> to vector<1x33xf32>
    %343 = vector.broadcast %341 : vector<8x1xf32> to vector<8x33xf32>
    %344 = vector.broadcast %342 : vector<1x33xf32> to vector<8x33xf32>
    %345 = arith.mulf %343, %344 : vector<8x33xf32>
    %346 = arith.addf %340, %345 : vector<8x33xf32>
    %347 = vector.extract_strided_slice %346 {offsets = [0, 0], sizes = [8, 1], strides = [1, 1]} : vector<8x33xf32> to vector<8x1xf32>
    %348 = vector.extract_strided_slice %346 {offsets = [0, 1], sizes = [8, 16], strides = [1, 1]} : vector<8x33xf32> to vector<8x16xf32>
    %349 = vector.extract_strided_slice %346 {offsets = [0, 17], sizes = [8, 16], strides = [1, 1]} : vector<8x33xf32> to vector<8x16xf32>
    %350 = vector.broadcast %347 : vector<8x1xf32> to vector<8x4xf32>
    %351 = vector.broadcast %4 : vector<1x4xf32> to vector<8x4xf32>
    %352 = arith.mulf %350, %351 : vector<8x4xf32>
    %353 = vector.broadcast %5 : vector<1x4xf32> to vector<8x4xf32>
    %354 = arith.addf %352, %353 : vector<8x4xf32>
    %cst_58 = arith.constant 0.000000e+00 : f32
    %355 = vector.broadcast %cst_58 : f32 to vector<8x4xf32>
    %356 = arith.maximumf %354, %355 : vector<8x4xf32>
    %357 = math.absf %354 : vector<8x4xf32>
    %cst_59 = arith.constant 0.000000e+00 : f32
    %358 = vector.broadcast %cst_59 : f32 to vector<8x4xf32>
    %359 = arith.subf %358, %357 : vector<8x4xf32>
    %360 = math.exp %359 : vector<8x4xf32>
    %cst_60 = arith.constant 1.000000e+00 : f32
    %361 = vector.broadcast %cst_60 : f32 to vector<8x4xf32>
    %362 = arith.addf %361, %360 : vector<8x4xf32>
    %363 = math.log %362 : vector<8x4xf32>
    %364 = arith.addf %356, %363 : vector<8x4xf32>
    %365 = arith.mulf %364, %323 : vector<8x4xf32>
    %366 = vector.broadcast %7 : vector<1x4xf32> to vector<8x4xf32>
    %367 = arith.mulf %323, %366 : vector<8x4xf32>
    %368 = tpu.transpose %348, [1, 0] : vector<8x16xf32> -> vector<16x8xf32>
    %369 = tpu.transpose %349, [1, 0] : vector<8x16xf32> -> vector<16x8xf32>
    %370 = vector.extract_strided_slice %364 {offsets = [0, 0], sizes = [1, 4], strides = [1, 1]} : vector<8x4xf32> to vector<1x4xf32>
    %371 = vector.broadcast %370 : vector<1x4xf32> to vector<16x4xf32>
    %372 = arith.mulf %371, %6 : vector<16x4xf32>
    %373 = math.exp %372 : vector<16x4xf32>
    %374 = vector.extract_strided_slice %364 {offsets = [1, 0], sizes = [1, 4], strides = [1, 1]} : vector<8x4xf32> to vector<1x4xf32>
    %375 = vector.broadcast %374 : vector<1x4xf32> to vector<16x4xf32>
    %376 = arith.mulf %375, %6 : vector<16x4xf32>
    %377 = math.exp %376 : vector<16x4xf32>
    %378 = vector.extract_strided_slice %364 {offsets = [2, 0], sizes = [1, 4], strides = [1, 1]} : vector<8x4xf32> to vector<1x4xf32>
    %379 = vector.broadcast %378 : vector<1x4xf32> to vector<16x4xf32>
    %380 = arith.mulf %379, %6 : vector<16x4xf32>
    %381 = math.exp %380 : vector<16x4xf32>
    %382 = vector.extract_strided_slice %364 {offsets = [3, 0], sizes = [1, 4], strides = [1, 1]} : vector<8x4xf32> to vector<1x4xf32>
    %383 = vector.broadcast %382 : vector<1x4xf32> to vector<16x4xf32>
    %384 = arith.mulf %383, %6 : vector<16x4xf32>
    %385 = math.exp %384 : vector<16x4xf32>
    %386 = vector.extract_strided_slice %364 {offsets = [4, 0], sizes = [1, 4], strides = [1, 1]} : vector<8x4xf32> to vector<1x4xf32>
    %387 = vector.broadcast %386 : vector<1x4xf32> to vector<16x4xf32>
    %388 = arith.mulf %387, %6 : vector<16x4xf32>
    %389 = math.exp %388 : vector<16x4xf32>
    %390 = vector.extract_strided_slice %364 {offsets = [5, 0], sizes = [1, 4], strides = [1, 1]} : vector<8x4xf32> to vector<1x4xf32>
    %391 = vector.broadcast %390 : vector<1x4xf32> to vector<16x4xf32>
    %392 = arith.mulf %391, %6 : vector<16x4xf32>
    %393 = math.exp %392 : vector<16x4xf32>
    %394 = vector.extract_strided_slice %364 {offsets = [6, 0], sizes = [1, 4], strides = [1, 1]} : vector<8x4xf32> to vector<1x4xf32>
    %395 = vector.broadcast %394 : vector<1x4xf32> to vector<16x4xf32>
    %396 = arith.mulf %395, %6 : vector<16x4xf32>
    %397 = math.exp %396 : vector<16x4xf32>
    %398 = vector.extract_strided_slice %364 {offsets = [7, 0], sizes = [1, 4], strides = [1, 1]} : vector<8x4xf32> to vector<1x4xf32>
    %399 = vector.broadcast %398 : vector<1x4xf32> to vector<16x4xf32>
    %400 = arith.mulf %399, %6 : vector<16x4xf32>
    %401 = math.exp %400 : vector<16x4xf32>
    %402 = vector.extract_strided_slice %368 {offsets = [0, 0], sizes = [16, 1], strides = [1, 1]} : vector<16x8xf32> to vector<16x1xf32>
    %403 = vector.extract_strided_slice %365 {offsets = [0, 0], sizes = [1, 4], strides = [1, 1]} : vector<8x4xf32> to vector<1x4xf32>
    %404 = vector.broadcast %402 : vector<16x1xf32> to vector<16x4xf32>
    %405 = vector.broadcast %403 : vector<1x4xf32> to vector<16x4xf32>
    %406 = arith.mulf %404, %405 : vector<16x4xf32>
    %407 = vector.extract_strided_slice %368 {offsets = [0, 1], sizes = [16, 1], strides = [1, 1]} : vector<16x8xf32> to vector<16x1xf32>
    %408 = vector.extract_strided_slice %365 {offsets = [1, 0], sizes = [1, 4], strides = [1, 1]} : vector<8x4xf32> to vector<1x4xf32>
    %409 = vector.broadcast %407 : vector<16x1xf32> to vector<16x4xf32>
    %410 = vector.broadcast %408 : vector<1x4xf32> to vector<16x4xf32>
    %411 = arith.mulf %409, %410 : vector<16x4xf32>
    %412 = vector.extract_strided_slice %368 {offsets = [0, 2], sizes = [16, 1], strides = [1, 1]} : vector<16x8xf32> to vector<16x1xf32>
    %413 = vector.extract_strided_slice %365 {offsets = [2, 0], sizes = [1, 4], strides = [1, 1]} : vector<8x4xf32> to vector<1x4xf32>
    %414 = vector.broadcast %412 : vector<16x1xf32> to vector<16x4xf32>
    %415 = vector.broadcast %413 : vector<1x4xf32> to vector<16x4xf32>
    %416 = arith.mulf %414, %415 : vector<16x4xf32>
    %417 = vector.extract_strided_slice %368 {offsets = [0, 3], sizes = [16, 1], strides = [1, 1]} : vector<16x8xf32> to vector<16x1xf32>
    %418 = vector.extract_strided_slice %365 {offsets = [3, 0], sizes = [1, 4], strides = [1, 1]} : vector<8x4xf32> to vector<1x4xf32>
    %419 = vector.broadcast %417 : vector<16x1xf32> to vector<16x4xf32>
    %420 = vector.broadcast %418 : vector<1x4xf32> to vector<16x4xf32>
    %421 = arith.mulf %419, %420 : vector<16x4xf32>
    %422 = vector.extract_strided_slice %368 {offsets = [0, 4], sizes = [16, 1], strides = [1, 1]} : vector<16x8xf32> to vector<16x1xf32>
    %423 = vector.extract_strided_slice %365 {offsets = [4, 0], sizes = [1, 4], strides = [1, 1]} : vector<8x4xf32> to vector<1x4xf32>
    %424 = vector.broadcast %422 : vector<16x1xf32> to vector<16x4xf32>
    %425 = vector.broadcast %423 : vector<1x4xf32> to vector<16x4xf32>
    %426 = arith.mulf %424, %425 : vector<16x4xf32>
    %427 = vector.extract_strided_slice %368 {offsets = [0, 5], sizes = [16, 1], strides = [1, 1]} : vector<16x8xf32> to vector<16x1xf32>
    %428 = vector.extract_strided_slice %365 {offsets = [5, 0], sizes = [1, 4], strides = [1, 1]} : vector<8x4xf32> to vector<1x4xf32>
    %429 = vector.broadcast %427 : vector<16x1xf32> to vector<16x4xf32>
    %430 = vector.broadcast %428 : vector<1x4xf32> to vector<16x4xf32>
    %431 = arith.mulf %429, %430 : vector<16x4xf32>
    %432 = vector.extract_strided_slice %368 {offsets = [0, 6], sizes = [16, 1], strides = [1, 1]} : vector<16x8xf32> to vector<16x1xf32>
    %433 = vector.extract_strided_slice %365 {offsets = [6, 0], sizes = [1, 4], strides = [1, 1]} : vector<8x4xf32> to vector<1x4xf32>
    %434 = vector.broadcast %432 : vector<16x1xf32> to vector<16x4xf32>
    %435 = vector.broadcast %433 : vector<1x4xf32> to vector<16x4xf32>
    %436 = arith.mulf %434, %435 : vector<16x4xf32>
    %437 = vector.extract_strided_slice %368 {offsets = [0, 7], sizes = [16, 1], strides = [1, 1]} : vector<16x8xf32> to vector<16x1xf32>
    %438 = vector.extract_strided_slice %365 {offsets = [7, 0], sizes = [1, 4], strides = [1, 1]} : vector<8x4xf32> to vector<1x4xf32>
    %439 = vector.broadcast %437 : vector<16x1xf32> to vector<16x4xf32>
    %440 = vector.broadcast %438 : vector<1x4xf32> to vector<16x4xf32>
    %441 = arith.mulf %439, %440 : vector<16x4xf32>
    %cst_61 = arith.constant 0.000000e+00 : f32
    %442 = vector.broadcast %cst_61 : f32 to vector<16x4xf32>
    %443 = arith.mulf %373, %442 : vector<16x4xf32>
    %444 = arith.addf %443, %406 : vector<16x4xf32>
    %445 = vector.extract_strided_slice %369 {offsets = [0, 0], sizes = [16, 1], strides = [1, 1]} : vector<16x8xf32> to vector<16x1xf32>
    %446 = vector.broadcast %445 : vector<16x1xf32> to vector<16x4xf32>
    %447 = arith.mulf %446, %444 : vector<16x4xf32>
    %cst_62 = arith.constant dense<0.000000e+00> : vector<4xf32>
    %448 = vector.multi_reduction <add>, %447, %cst_62 [0] : vector<16x4xf32> to vector<4xf32>
    %449 = vector.shape_cast %448 : vector<4xf32> to vector<1x4xf32>
    %c0_63 = arith.constant 0 : index
    %c0_64 = arith.constant 0 : index
    %450 = vector.load %arg13[%c0_63, %c0_64] : memref<8x4xf32, #tpu.memory_space<vmem>>, vector<1x4xf32>
    tpu.vector_store %arg13[%c0_63, %c0_64], %449 {strides = array<i32>} : memref<8x4xf32, #tpu.memory_space<vmem>>, vector<1x4xf32>,
    %451 = arith.mulf %377, %444 : vector<16x4xf32>
    %452 = arith.addf %451, %411 : vector<16x4xf32>
    %453 = vector.extract_strided_slice %369 {offsets = [0, 1], sizes = [16, 1], strides = [1, 1]} : vector<16x8xf32> to vector<16x1xf32>
    %454 = vector.broadcast %453 : vector<16x1xf32> to vector<16x4xf32>
    %455 = arith.mulf %454, %452 : vector<16x4xf32>
    %cst_65 = arith.constant dense<0.000000e+00> : vector<4xf32>
    %456 = vector.multi_reduction <add>, %455, %cst_65 [0] : vector<16x4xf32> to vector<4xf32>
    %457 = vector.shape_cast %456 : vector<4xf32> to vector<1x4xf32>
    %c1_66 = arith.constant 1 : index
    %c0_67 = arith.constant 0 : index
    %458 = vector.load %arg13[%c1_66, %c0_67] : memref<8x4xf32, #tpu.memory_space<vmem>>, vector<1x4xf32>
    tpu.vector_store %arg13[%c1_66, %c0_67], %457 {strides = array<i32>} : memref<8x4xf32, #tpu.memory_space<vmem>>, vector<1x4xf32>,
    %459 = arith.mulf %381, %452 : vector<16x4xf32>
    %460 = arith.addf %459, %416 : vector<16x4xf32>
    %461 = vector.extract_strided_slice %369 {offsets = [0, 2], sizes = [16, 1], strides = [1, 1]} : vector<16x8xf32> to vector<16x1xf32>
    %462 = vector.broadcast %461 : vector<16x1xf32> to vector<16x4xf32>
    %463 = arith.mulf %462, %460 : vector<16x4xf32>
    %cst_68 = arith.constant dense<0.000000e+00> : vector<4xf32>
    %464 = vector.multi_reduction <add>, %463, %cst_68 [0] : vector<16x4xf32> to vector<4xf32>
    %465 = vector.shape_cast %464 : vector<4xf32> to vector<1x4xf32>
    %c2_69 = arith.constant 2 : index
    %c0_70 = arith.constant 0 : index
    %466 = vector.load %arg13[%c2_69, %c0_70] : memref<8x4xf32, #tpu.memory_space<vmem>>, vector<1x4xf32>
    tpu.vector_store %arg13[%c2_69, %c0_70], %465 {strides = array<i32>} : memref<8x4xf32, #tpu.memory_space<vmem>>, vector<1x4xf32>,
    %467 = arith.mulf %385, %460 : vector<16x4xf32>
    %468 = arith.addf %467, %421 : vector<16x4xf32>
    %469 = vector.extract_strided_slice %369 {offsets = [0, 3], sizes = [16, 1], strides = [1, 1]} : vector<16x8xf32> to vector<16x1xf32>
    %470 = vector.broadcast %469 : vector<16x1xf32> to vector<16x4xf32>
    %471 = arith.mulf %470, %468 : vector<16x4xf32>
    %cst_71 = arith.constant dense<0.000000e+00> : vector<4xf32>
    %472 = vector.multi_reduction <add>, %471, %cst_71 [0] : vector<16x4xf32> to vector<4xf32>
    %473 = vector.shape_cast %472 : vector<4xf32> to vector<1x4xf32>
    %c3_72 = arith.constant 3 : index
    %c0_73 = arith.constant 0 : index
    %474 = vector.load %arg13[%c3_72, %c0_73] : memref<8x4xf32, #tpu.memory_space<vmem>>, vector<1x4xf32>
    tpu.vector_store %arg13[%c3_72, %c0_73], %473 {strides = array<i32>} : memref<8x4xf32, #tpu.memory_space<vmem>>, vector<1x4xf32>,
    %475 = arith.mulf %389, %468 : vector<16x4xf32>
    %476 = arith.addf %475, %426 : vector<16x4xf32>
    %477 = vector.extract_strided_slice %369 {offsets = [0, 4], sizes = [16, 1], strides = [1, 1]} : vector<16x8xf32> to vector<16x1xf32>
    %478 = vector.broadcast %477 : vector<16x1xf32> to vector<16x4xf32>
    %479 = arith.mulf %478, %476 : vector<16x4xf32>
    %cst_74 = arith.constant dense<0.000000e+00> : vector<4xf32>
    %480 = vector.multi_reduction <add>, %479, %cst_74 [0] : vector<16x4xf32> to vector<4xf32>
    %481 = vector.shape_cast %480 : vector<4xf32> to vector<1x4xf32>
    %c4_75 = arith.constant 4 : index
    %c0_76 = arith.constant 0 : index
    %482 = vector.load %arg13[%c4_75, %c0_76] : memref<8x4xf32, #tpu.memory_space<vmem>>, vector<1x4xf32>
    tpu.vector_store %arg13[%c4_75, %c0_76], %481 {strides = array<i32>} : memref<8x4xf32, #tpu.memory_space<vmem>>, vector<1x4xf32>,
    %483 = arith.mulf %393, %476 : vector<16x4xf32>
    %484 = arith.addf %483, %431 : vector<16x4xf32>
    %485 = vector.extract_strided_slice %369 {offsets = [0, 5], sizes = [16, 1], strides = [1, 1]} : vector<16x8xf32> to vector<16x1xf32>
    %486 = vector.broadcast %485 : vector<16x1xf32> to vector<16x4xf32>
    %487 = arith.mulf %486, %484 : vector<16x4xf32>
    %cst_77 = arith.constant dense<0.000000e+00> : vector<4xf32>
    %488 = vector.multi_reduction <add>, %487, %cst_77 [0] : vector<16x4xf32> to vector<4xf32>
    %489 = vector.shape_cast %488 : vector<4xf32> to vector<1x4xf32>
    %c5_78 = arith.constant 5 : index
    %c0_79 = arith.constant 0 : index
    %490 = vector.load %arg13[%c5_78, %c0_79] : memref<8x4xf32, #tpu.memory_space<vmem>>, vector<1x4xf32>
    tpu.vector_store %arg13[%c5_78, %c0_79], %489 {strides = array<i32>} : memref<8x4xf32, #tpu.memory_space<vmem>>, vector<1x4xf32>,
    %491 = arith.mulf %397, %484 : vector<16x4xf32>
    %492 = arith.addf %491, %436 : vector<16x4xf32>
    %493 = vector.extract_strided_slice %369 {offsets = [0, 6], sizes = [16, 1], strides = [1, 1]} : vector<16x8xf32> to vector<16x1xf32>
    %494 = vector.broadcast %493 : vector<16x1xf32> to vector<16x4xf32>
    %495 = arith.mulf %494, %492 : vector<16x4xf32>
    %cst_80 = arith.constant dense<0.000000e+00> : vector<4xf32>
    %496 = vector.multi_reduction <add>, %495, %cst_80 [0] : vector<16x4xf32> to vector<4xf32>
    %497 = vector.shape_cast %496 : vector<4xf32> to vector<1x4xf32>
    %c6_81 = arith.constant 6 : index
    %c0_82 = arith.constant 0 : index
    %498 = vector.load %arg13[%c6_81, %c0_82] : memref<8x4xf32, #tpu.memory_space<vmem>>, vector<1x4xf32>
    tpu.vector_store %arg13[%c6_81, %c0_82], %497 {strides = array<i32>} : memref<8x4xf32, #tpu.memory_space<vmem>>, vector<1x4xf32>,
    %499 = arith.mulf %401, %492 : vector<16x4xf32>
    %500 = arith.addf %499, %441 : vector<16x4xf32>
    %501 = vector.extract_strided_slice %369 {offsets = [0, 7], sizes = [16, 1], strides = [1, 1]} : vector<16x8xf32> to vector<16x1xf32>
    %502 = vector.broadcast %501 : vector<16x1xf32> to vector<16x4xf32>
    %503 = arith.mulf %502, %500 : vector<16x4xf32>
    %cst_83 = arith.constant dense<0.000000e+00> : vector<4xf32>
    %504 = vector.multi_reduction <add>, %503, %cst_83 [0] : vector<16x4xf32> to vector<4xf32>
    %505 = vector.shape_cast %504 : vector<4xf32> to vector<1x4xf32>
    %c7_84 = arith.constant 7 : index
    %c0_85 = arith.constant 0 : index
    %506 = vector.load %arg13[%c7_84, %c0_85] : memref<8x4xf32, #tpu.memory_space<vmem>>, vector<1x4xf32>
    tpu.vector_store %arg13[%c7_84, %c0_85], %505 {strides = array<i32>} : memref<8x4xf32, #tpu.memory_space<vmem>>, vector<1x4xf32>,
    %c0_86 = arith.constant 0 : index
    %c0_87 = arith.constant 0 : index
    %507 = vector.load %arg13[%c0_86, %c0_87] : memref<8x4xf32, #tpu.memory_space<vmem>>, vector<8x4xf32>
    %508 = arith.addf %507, %367 : vector<8x4xf32>
    %cst_88 = arith.constant 0.000000e+00 : f32
    %509 = vector.broadcast %cst_88 : f32 to vector<8x4xf32>
    %510 = arith.subf %509, %293 : vector<8x4xf32>
    %511 = math.exp %510 : vector<8x4xf32>
    %cst_89 = arith.constant 1.000000e+00 : f32
    %512 = vector.broadcast %cst_89 : f32 to vector<8x4xf32>
    %513 = arith.addf %512, %511 : vector<8x4xf32>
    %514 = tpu.reciprocal %513 : vector<8x4xf32> -> vector<8x4xf32>
    %515 = arith.mulf %293, %514 : vector<8x4xf32>
    %516 = arith.mulf %508, %515 : vector<8x4xf32>
    %517 = vector.extract_strided_slice %516 {offsets = [0, 0], sizes = [8, 1], strides = [1, 1]} : vector<8x4xf32> to vector<8x1xf32>
    %518 = vector.extract_strided_slice %8 {offsets = [0, 0], sizes = [1, 2], strides = [1, 1]} : vector<4x2xf32> to vector<1x2xf32>
    %519 = vector.broadcast %517 : vector<8x1xf32> to vector<8x2xf32>
    %520 = vector.broadcast %518 : vector<1x2xf32> to vector<8x2xf32>
    %521 = arith.mulf %519, %520 : vector<8x2xf32>
    %522 = vector.extract_strided_slice %516 {offsets = [0, 1], sizes = [8, 1], strides = [1, 1]} : vector<8x4xf32> to vector<8x1xf32>
    %523 = vector.extract_strided_slice %8 {offsets = [1, 0], sizes = [1, 2], strides = [1, 1]} : vector<4x2xf32> to vector<1x2xf32>
    %524 = vector.broadcast %522 : vector<8x1xf32> to vector<8x2xf32>
    %525 = vector.broadcast %523 : vector<1x2xf32> to vector<8x2xf32>
    %526 = arith.mulf %524, %525 : vector<8x2xf32>
    %527 = arith.addf %521, %526 : vector<8x2xf32>
    %528 = vector.extract_strided_slice %516 {offsets = [0, 2], sizes = [8, 1], strides = [1, 1]} : vector<8x4xf32> to vector<8x1xf32>
    %529 = vector.extract_strided_slice %8 {offsets = [2, 0], sizes = [1, 2], strides = [1, 1]} : vector<4x2xf32> to vector<1x2xf32>
    %530 = vector.broadcast %528 : vector<8x1xf32> to vector<8x2xf32>
    %531 = vector.broadcast %529 : vector<1x2xf32> to vector<8x2xf32>
    %532 = arith.mulf %530, %531 : vector<8x2xf32>
    %533 = arith.addf %527, %532 : vector<8x2xf32>
    %534 = vector.extract_strided_slice %516 {offsets = [0, 3], sizes = [8, 1], strides = [1, 1]} : vector<8x4xf32> to vector<8x1xf32>
    %535 = vector.extract_strided_slice %8 {offsets = [3, 0], sizes = [1, 2], strides = [1, 1]} : vector<4x2xf32> to vector<1x2xf32>
    %536 = vector.broadcast %534 : vector<8x1xf32> to vector<8x2xf32>
    %537 = vector.broadcast %535 : vector<1x2xf32> to vector<8x2xf32>
    %538 = arith.mulf %536, %537 : vector<8x2xf32>
    %539 = arith.addf %533, %538 : vector<8x2xf32>
    %540 = vector.broadcast %9 : vector<1x2xf32> to vector<8x2xf32>
    %541 = arith.addf %539, %540 : vector<8x2xf32>
    %542 = tpu.transpose %541, [1, 0] : vector<8x2xf32> -> vector<2x8xf32>
    %c1_90 = arith.constant 1 : index
    %c0_91 = arith.constant 0 : index
    %c0_92 = arith.constant 0 : index
    %543 = vector.load %arg12[%c1_90, %c0_91, %c0_92] : memref<2x2x8xf32, #tpu.memory_space<vmem>>, vector<1x2x8xf32>
    %544 = vector.shape_cast %543 : vector<1x2x8xf32> to vector<2x8xf32>
    %545 = vector.shape_cast %542 : vector<2x8xf32> to vector<1x2x8xf32>
    tpu.vector_store %arg12[%c1_90, %c0_91, %c0_92], %545 {strides = array<i32>} : memref<2x2x8xf32, #tpu.memory_space<vmem>>, vector<1x2x8xf32>,
    return
  }
  func.func @transform_0(%arg0: i32) -> (i32, i32, i32) {
    %c0_i32 = arith.constant 0 : i32
    %c0_i32_0 = arith.constant 0 : i32
    %c0_i32_1 = arith.constant 0 : i32
    %c0_i32_2 = arith.constant 0 : i32
    return %c0_i32, %c0_i32_0, %c0_i32_1 : i32, i32, i32
  }
  func.func @transform_1(%arg0: i32) -> (i32, i32) {
    %c0_i32 = arith.constant 0 : i32
    %c0_i32_0 = arith.constant 0 : i32
    %c0_i32_1 = arith.constant 0 : i32
    return %c0_i32, %c0_i32_0 : i32, i32
  }
  func.func @transform_2(%arg0: i32) -> (i32, i32) {
    %c0_i32 = arith.constant 0 : i32
    %c0_i32_0 = arith.constant 0 : i32
    %c0_i32_1 = arith.constant 0 : i32
    return %c0_i32, %c0_i32_0 : i32, i32
  }
  func.func @transform_3(%arg0: i32) -> (i32, i32) {
    %c0_i32 = arith.constant 0 : i32
    %c0_i32_0 = arith.constant 0 : i32
    %c0_i32_1 = arith.constant 0 : i32
    return %c0_i32, %c0_i32_0 : i32, i32
  }
  func.func @transform_4(%arg0: i32) -> (i32, i32) {
    %c0_i32 = arith.constant 0 : i32
    %c0_i32_0 = arith.constant 0 : i32
    %c0_i32_1 = arith.constant 0 : i32
    return %c0_i32, %c0_i32_0 : i32, i32
  }
  func.func @transform_5(%arg0: i32) -> (i32, i32) {
    %c0_i32 = arith.constant 0 : i32
    %c0_i32_0 = arith.constant 0 : i32
    %c0_i32_1 = arith.constant 0 : i32
    return %c0_i32, %c0_i32_0 : i32, i32
  }
  func.func @transform_6(%arg0: i32) -> (i32, i32) {
    %c0_i32 = arith.constant 0 : i32
    %c0_i32_0 = arith.constant 0 : i32
    %c0_i32_1 = arith.constant 0 : i32
    return %c0_i32, %c0_i32_0 : i32, i32
  }
  func.func @transform_7(%arg0: i32) -> (i32, i32) {
    %c0_i32 = arith.constant 0 : i32
    %c0_i32_0 = arith.constant 0 : i32
    %c0_i32_1 = arith.constant 0 : i32
    return %c0_i32, %c0_i32_0 : i32, i32
  }
  func.func @transform_8(%arg0: i32) -> (i32, i32) {
    %c0_i32 = arith.constant 0 : i32
    %c0_i32_0 = arith.constant 0 : i32
    %c0_i32_1 = arith.constant 0 : i32
    return %c0_i32, %c0_i32_0 : i32, i32
  }
  func.func @transform_9(%arg0: i32) -> (i32, i32) {
    %c0_i32 = arith.constant 0 : i32
    %c0_i32_0 = arith.constant 0 : i32
    %c0_i32_1 = arith.constant 0 : i32
    return %c0_i32, %c0_i32_0 : i32, i32
  }
  func.func @transform_10(%arg0: i32) -> (i32, i32) {
    %c0_i32 = arith.constant 0 : i32
    %c0_i32_0 = arith.constant 0 : i32
    %c0_i32_1 = arith.constant 0 : i32
    return %c0_i32, %c0_i32_0 : i32, i32
  }
  func.func @transform_11(%arg0: i32) -> (i32, i32, i32) {
    %c0_i32 = arith.constant 0 : i32
    %c0_i32_0 = arith.constant 0 : i32
    %c0_i32_1 = arith.constant 0 : i32
    %c0_i32_2 = arith.constant 0 : i32
    return %c0_i32, %c0_i32_0, %c0_i32_1 : i32, i32, i32
  }
}

</mosaic_0001>

<llo_original>
// kernel: tpu_custom_call.1
$region0: #{tpu_custom_call.1}
  #allocation0 [shape = 'u32[]', space=smem, size = 0x4, offset = 0x4, fixed_abs, tag = 'smem constant byte address 0x4 - core index']
  #allocation1 [shape = 'u32[144,128]{1,0:T(1,128)}', space=vmem, size = 0x12000, scoped, tag = 'internal scratch']
  #allocation2 [shape = 'f32[8,4]{1,0:T(8,128)}', space=vmem, size = 0x1000, scoped, tag = 'scratch operand']
  %s0 = inlined_call_operand.vmem [shape: f32[2,2,8], index: 0, kind: input, shape index: {}]
  %s1 = inlined_call_operand.vmem [shape: f32[2,8], index: 1, kind: input, shape index: {}]
  %s2 = inlined_call_operand.vmem [shape: f32[4,4], index: 2, kind: input, shape index: {}]
  %s3 = inlined_call_operand.vmem [shape: f32[1,4], index: 3, kind: input, shape index: {}]
  %s4 = inlined_call_operand.vmem [shape: f32[4,33], index: 4, kind: input, shape index: {}]
  %s5 = inlined_call_operand.vmem [shape: f32[1,4], index: 5, kind: input, shape index: {}]
  %s6 = inlined_call_operand.vmem [shape: f32[1,4], index: 6, kind: input, shape index: {}]
  %s7 = inlined_call_operand.vmem [shape: f32[16,4], index: 7, kind: input, shape index: {}]
  %s8 = inlined_call_operand.vmem [shape: f32[1,4], index: 8, kind: input, shape index: {}]
  %s9 = inlined_call_operand.vmem [shape: f32[4,2], index: 9, kind: input, shape index: {}]
  %s10 = inlined_call_operand.vmem [shape: f32[1,2], index: 10, kind: input, shape index: {}]
  %s11 = inlined_call_operand.hbm [shape: f32[2,2,8], index: 11, kind: output, shape index: {}]
  %s12 = sld [smem:[#allocation0]]
  $region54: #{tpu_custom_call.1} parent=0
    _
  %s14 = ssub.s32 1, %s12
  %s15 = scalar_select 0, %s14, %s12
  $region1: #{tpu_custom_call.1} parent=0
    #allocation3 [shape = 'u8[2048]{0}', space=vmem, size = 0x800, scoped, tag = 'output window, operand 0, single buffered']
    #allocation4 [shape = 's32[1]{0}', space=sflag, size = 0x4, scoped, tag = 'scoped memory for tpu_custom_call.1']
    %16 = vsyncpa [#allocation4], 0
    // Predicated region
    $region2: #{tpu_custom_call.1} parent=1 // pred_check
      _
    $region3: #{tpu_custom_call.1} parent=1 // pred_check_branch
      %18 = sbr.rel (0) target = $region5
    $region4: #{tpu_custom_call.1} parent=1 // pred_region
      _
    $region5: #{tpu_custom_call.1} parent=1 // pred_fallthru
      _
    // Predicated region
    $region6: #{tpu_custom_call.1} parent=1 // pred_check
      _
    $region7: #{tpu_custom_call.1} parent=1 // pred_check_branch
      %20 = sbr.rel (0) target = $region9
    $region8: #{tpu_custom_call.1} parent=1 // pred_region
      _
    $region9: #{tpu_custom_call.1} parent=1 // pred_fallthru
      _
    // Predicated region
    $region10: #{tpu_custom_call.1} parent=1 // pred_check
      _
    $region11: #{tpu_custom_call.1} parent=1 // pred_check_branch
      %22 = sbr.rel (0) target = $region13
    $region12: #{tpu_custom_call.1} parent=1 // pred_region
      _
    $region13: #{tpu_custom_call.1} parent=1 // pred_fallthru
      _
    // Predicated region
    $region14: #{tpu_custom_call.1} parent=1 // pred_check
      _
    $region15: #{tpu_custom_call.1} parent=1 // pred_check_branch
      %24 = sbr.rel (0) target = $region17
    $region16: #{tpu_custom_call.1} parent=1 // pred_region
      _
    $region17: #{tpu_custom_call.1} parent=1 // pred_fallthru
      _
    // Predicated region
    $region18: #{tpu_custom_call.1} parent=1 // pred_check
      _
    $region19: #{tpu_custom_call.1} parent=1 // pred_check_branch
      %26 = sbr.rel (0) target = $region21
    $region20: #{tpu_custom_call.1} parent=1 // pred_region
      _
    $region21: #{tpu_custom_call.1} parent=1 // pred_fallthru
      _
    // Predicated region
    $region22: #{tpu_custom_call.1} parent=1 // pred_check
      _
    $region23: #{tpu_custom_call.1} parent=1 // pred_check_branch
      %28 = sbr.rel (0) target = $region25
    $region24: #{tpu_custom_call.1} parent=1 // pred_region
      _
    $region25: #{tpu_custom_call.1} parent=1 // pred_fallthru
      _
    // Predicated region
    $region26: #{tpu_custom_call.1} parent=1 // pred_check
      _
    $region27: #{tpu_custom_call.1} parent=1 // pred_check_branch
      %30 = sbr.rel (0) target = $region29
    $region28: #{tpu_custom_call.1} parent=1 // pred_region
      _
    $region29: #{tpu_custom_call.1} parent=1 // pred_fallthru
      _
    // Predicated region
    $region30: #{tpu_custom_call.1} parent=1 // pred_check
      _
    $region31: #{tpu_custom_call.1} parent=1 // pred_check_branch
      %32 = sbr.rel (0) target = $region33
    $region32: #{tpu_custom_call.1} parent=1 // pred_region
      _
    $region33: #{tpu_custom_call.1} parent=1 // pred_fallthru
      _
    // Predicated region
    $region34: #{tpu_custom_call.1} parent=1 // pred_check
      _
    $region35: #{tpu_custom_call.1} parent=1 // pred_check_branch
      %34 = sbr.rel (0) target = $region37
    $region36: #{tpu_custom_call.1} parent=1 // pred_region
      _
    $region37: #{tpu_custom_call.1} parent=1 // pred_fallthru
      _
    // Predicated region
    $region38: #{tpu_custom_call.1} parent=1 // pred_check
      _
    $region39: #{tpu_custom_call.1} parent=1 // pred_check_branch
      %36 = sbr.rel (0) target = $region41
    $region40: #{tpu_custom_call.1} parent=1 // pred_region
      _
    $region41: #{tpu_custom_call.1} parent=1 // pred_fallthru
      _
    // Predicated region
    $region42: #{tpu_custom_call.1} parent=1 // pred_check
      _
    $region43: #{tpu_custom_call.1} parent=1 // pred_check_branch
      %38 = sbr.rel (0) target = $region45
    $region44: #{tpu_custom_call.1} parent=1 // pred_region
      _
    $region45: #{tpu_custom_call.1} parent=1 // pred_fallthru
      _
    %v39 = vld [vmem:[%s1] sm:$0x3]
    %v40 = vld [vmem:[%s2] sm:$0xf]
    %v41 = vld [vmem:[%s3] sm:$0x1]
    %v42 = vld [vmem:[%s4] sm:$0xf]
    %v43 = vld [vmem:[%s5] sm:$0x1]
    %v44 = vld [vmem:[%s6] sm:$0x1]
    %v45 = vld [vmem:[%s7] sm:$0xff]
    %v46 = vld [vmem:[%s7 + $0x8] sm:$0xff]
    %v47 = vld [vmem:[%s8] sm:$0x1]
    %v48 = vld [vmem:[%s9] sm:$0xf]
    %v49 = vld [vmem:[%s10] sm:$0x1]
    %v50 = vld [vmem:[%s0] sm:$0x3]
    %51 = vxpose.xlu0.b32.start [1/16] %v50, 128
    %52 = vxpose.xlu0.b32.cont [2/16] 0.0, 128
    %53 = vxpose.xlu0.b32.cont [3/16] 0.0, 128
    %54 = vxpose.xlu0.b32.cont [4/16] 0.0, 128
    %55 = vxpose.xlu0.b32.cont [5/16] 0.0, 128
    %56 = vxpose.xlu0.b32.cont [6/16] 0.0, 128
    %57 = vxpose.xlu0.b32.cont [7/16] 0.0, 128
    %58 = vxpose.xlu0.b32.cont [8/16] 0.0, 128
    %59 = vxpose.xlu0.b32.cont [9/16] 0.0, 128
    %60 = vxpose.xlu0.b32.cont [10/16] 0.0, 128
    %61 = vxpose.xlu0.b32.cont [11/16] 0.0, 128
    %62 = vxpose.xlu0.b32.cont [12/16] 0.0, 128
    %63 = vxpose.xlu0.b32.cont [13/16] 0.0, 128
    %64 = vxpose.xlu0.b32.cont [14/16] 0.0, 128
    %65 = vxpose.xlu0.b32.cont [15/16] 0.0, 128
    %66 = vxpose.xlu0.b32.end [16/16] 0.0, 128
    %v67 = vpop.trf.xlu0
    %v68 = vpop.trf.xlu0
    %v69 = vpop.trf.xlu0
    %v70 = vpop.trf.xlu0
    %v71 = vpop.trf.xlu0
    %v72 = vpop.trf.xlu0
    %v73 = vpop.trf.xlu0
    %v74 = vpop.trf.xlu0
    %v75 = vpop.trf.xlu0
    %v76 = vpop.trf.xlu0
    %v77 = vpop.trf.xlu0
    %v78 = vpop.trf.xlu0
    %v79 = vpop.trf.xlu0
    %v80 = vpop.trf.xlu0
    %v81 = vpop.trf.xlu0
    %v82 = vpop.trf.xlu0
    %84 = vset.pattern.permute.xlu0 0
    %85 = vperm.xlu0 %84, %v67
    %v86 = vpop.permute.xlu0 %85
    %v88 = vlaneseq
    %v89 = vshrl.u32 %v88, 7
    %v90 = vsub.s32 0, %v89
    %v91 = vrot.slane %v39, %v90
    %v92 = vmul.f32 %v86, %v91
    %93 = vset.pattern.permute.xlu0 1
    %94 = vperm.xlu0 %93, %v67
    %v95 = vpop.permute.xlu0 %94
    %v97 = vlaneseq
    %v98 = vshrl.u32 %v97, 7
    %v99 = vsub.s32 1, %v98
    %v100 = vrot.slane %v39, %v99
    %v101 = vmul.f32 %v95, %v100
    %v102 = vadd.f32 %v92, %v101
    %v104 = vrot.slane %v102, 5
    %vm106 = vcmask 1042432
    %v107 = vsel %vm106, 0.0, %v104
    %v108 = vlaneseq
    %v109 = vshrl.u32 %v108, 7
    %v110 = vsub.s32 0, %v109
    %v111 = vrot.slane %v40, %v110
    %v112 = vmul.f32 %v107, %v111
    %v114 = vlaneseq
    %v115 = vshrl.u32 %v114, 7
    %v116 = vsub.s32 0, %v115
    %v117 = vrot.slane %v41, %v116
    %v119 = vadd.f32 %v117, %v112
    %v120 = vlaneseq
    %v121 = vshrl.u32 %v120, 7
    %v122 = vsub.s32 1, %v121
    %v123 = vrot.slane %v40, %v122
    %v124 = vmul.f32 %v107, %v123
    %v125 = vmul.f32 %v104, %v123
    %vm128 = vcmask 1046528
    %v129 = vrot.slane %v124, 1
    %v130 = vrot.slane %v125, 1
    %v131 = vsel %vm128, %v129, %v130
    %v133 = vadd.f32 %v119, %v131
    %v134 = vlaneseq
    %v135 = vshrl.u32 %v134, 7
    %v136 = vsub.s32 2, %v135
    %v137 = vrot.slane %v40, %v136
    %v138 = vmul.f32 %v107, %v137
    %v139 = vmul.f32 %v104, %v137
    %vm142 = vcmask 1045504
    %v143 = vrot.slane %v138, 2
    %v144 = vrot.slane %v139, 2
    %v145 = vsel %vm142, %v143, %v144
    %v147 = vadd.f32 %v133, %v145
    %v148 = vlaneseq
    %v149 = vshrl.u32 %v148, 7
    %v150 = vsub.s32 3, %v149
    %v151 = vrot.slane %v40, %v150
    %v152 = vmul.f32 %v107, %v151
    %v153 = vmul.f32 %v104, %v151
    %vm156 = vcmask 1044480
    %v157 = vrot.slane %v152, 3
    %v158 = vrot.slane %v153, 3
    %v159 = vsel %vm156, %v157, %v158
    %v161 = vadd.f32 %v147, %v159
    %v162 = vsub.f32 0.0, %v161
    %v163 = vmul.f32 %v162, 1.442695
    %v164 = vpow.pop %v163
    %v165 = vadd.f32 %v164, 1.0
    %v166 = vrcp.pop %v165
    %v167 = vmul.f32 %v161, %v166
    %169 = vset.pattern.permute.xlu0 0
    %170 = vperm.xlu0 %169, %v167
    %v171 = vpop.permute.xlu0 %170
    %v173 = vlaneseq
    %v174 = vshrl.u32 %v173, 7
    %v175 = vsub.s32 0, %v174
    %v176 = vrot.slane %v42, %v175
    %v177 = vmul.f32 %v171, %v176
    %178 = vset.pattern.permute.xlu0 1
    %179 = vperm.xlu0 %178, %v167
    %v180 = vpop.permute.xlu0 %179
    %v182 = vlaneseq
    %v183 = vshrl.u32 %v182, 7
    %v184 = vsub.s32 1, %v183
    %v185 = vrot.slane %v42, %v184
    %v186 = vmul.f32 %v180, %v185
    %v187 = vadd.f32 %v177, %v186
    %188 = vset.pattern.permute.xlu0 2
    %189 = vperm.xlu0 %188, %v167
    %v190 = vpop.permute.xlu0 %189
    %v192 = vlaneseq
    %v193 = vshrl.u32 %v192, 7
    %v194 = vsub.s32 2, %v193
    %v195 = vrot.slane %v42, %v194
    %v196 = vmul.f32 %v190, %v195
    %v197 = vadd.f32 %v187, %v196
    %198 = vset.pattern.permute.xlu0 3
    %199 = vperm.xlu0 %198, %v167
    %v200 = vpop.permute.xlu0 %199
    %v202 = vlaneseq
    %v203 = vshrl.u32 %v202, 7
    %v204 = vsub.s32 3, %v203
    %v205 = vrot.slane %v42, %v204
    %v206 = vmul.f32 %v200, %v205
    %v207 = vadd.f32 %v197, %v206
    %209 = vset.pattern.permute.xlu0 0
    %210 = vperm.xlu0 %209, %v207
    %v211 = vpop.permute.xlu0 %210
    %v214 = vlaneseq
    %v215 = vshrl.u32 %v214, 7
    %v216 = vsub.s32 0, %v215
    %v217 = vrot.slane %v43, %v216
    %v219 = vmul.f32 %v211, %v217
    %v221 = vlaneseq
    %v222 = vshrl.u32 %v221, 7
    %v223 = vsub.s32 0, %v222
    %v224 = vrot.slane %v44, %v223
    %v226 = vadd.f32 %v219, %v224
    %v227 = vmax.f32 %v226, 0.0
    %v228 = vand.u32 2147483647, %v226
    %v229 = vsub.f32 0.0, %v228
    %v230 = vmul.f32 %v229, 1.442695
    %v231 = vpow.pop %v230
    %v232 = vadd.f32 %v231, 1.0
    %v233 = vlog2.pop %v232
    %v234 = vmul.f32 %v233, 0.6931472
    %v235 = vadd.f32 %v227, %v234
    %v236 = vmul.f32 %v235, %v167
    %v238 = vlaneseq
    %v239 = vshrl.u32 %v238, 7
    %v240 = vsub.s32 0, %v239
    %v241 = vrot.slane %v47, %v240
    %v243 = vmul.f32 %v167, %v241
    %244 = vrot.lane.b32.xlu0 %v207, 127
    %v245 = vpop.permute.xlu0 %244
    %247 = vxpose.xlu0.b32.start [1/16] %v245, 128
    %248 = vxpose.xlu0.b32.cont [2/16] 0.0, 128
    %249 = vxpose.xlu0.b32.cont [3/16] 0.0, 128
    %250 = vxpose.xlu0.b32.cont [4/16] 0.0, 128
    %251 = vxpose.xlu0.b32.cont [5/16] 0.0, 128
    %252 = vxpose.xlu0.b32.cont [6/16] 0.0, 128
    %253 = vxpose.xlu0.b32.cont [7/16] 0.0, 128
    %254 = vxpose.xlu0.b32.cont [8/16] 0.0, 128
    %255 = vxpose.xlu0.b32.cont [9/16] 0.0, 128
    %256 = vxpose.xlu0.b32.cont [10/16] 0.0, 128
    %257 = vxpose.xlu0.b32.cont [11/16] 0.0, 128
    %258 = vxpose.xlu0.b32.cont [12/16] 0.0, 128
    %259 = vxpose.xlu0.b32.cont [13/16] 0.0, 128
    %260 = vxpose.xlu0.b32.cont [14/16] 0.0, 128
    %261 = vxpose.xlu0.b32.cont [15/16] 0.0, 128
    %262 = vxpose.xlu0.b32.end [16/16] 0.0, 128
    %v263 = vpop.trf.xlu0
    %v264 = vpop.trf.xlu0
    %v265 = vpop.trf.xlu0
    %v266 = vpop.trf.xlu0
    %v267 = vpop.trf.xlu0
    %v268 = vpop.trf.xlu0
    %v269 = vpop.trf.xlu0
    %v270 = vpop.trf.xlu0
    %v271 = vpop.trf.xlu0
    %v272 = vpop.trf.xlu0
    %v273 = vpop.trf.xlu0
    %v274 = vpop.trf.xlu0
    %v275 = vpop.trf.xlu0
    %v276 = vpop.trf.xlu0
    %v277 = vpop.trf.xlu0
    %v278 = vpop.trf.xlu0
    %279 = vrot.lane.b32.xlu0 %v207, 111
    %v280 = vpop.permute.xlu0 %279
    %282 = vxpose.xlu0.b32.start [1/16] %v280, 128
    %283 = vxpose.xlu0.b32.cont [2/16] 0.0, 128
    %284 = vxpose.xlu0.b32.cont [3/16] 0.0, 128
    %285 = vxpose.xlu0.b32.cont [4/16] 0.0, 128
    %286 = vxpose.xlu0.b32.cont [5/16] 0.0, 128
    %287 = vxpose.xlu0.b32.cont [6/16] 0.0, 128
    %288 = vxpose.xlu0.b32.cont [7/16] 0.0, 128
    %289 = vxpose.xlu0.b32.cont [8/16] 0.0, 128
    %290 = vxpose.xlu0.b32.cont [9/16] 0.0, 128
    %291 = vxpose.xlu0.b32.cont [10/16] 0.0, 128
    %292 = vxpose.xlu0.b32.cont [11/16] 0.0, 128
    %293 = vxpose.xlu0.b32.cont [12/16] 0.0, 128
    %294 = vxpose.xlu0.b32.cont [13/16] 0.0, 128
    %295 = vxpose.xlu0.b32.cont [14/16] 0.0, 128
    %296 = vxpose.xlu0.b32.cont [15/16] 0.0, 128
    %297 = vxpose.xlu0.b32.end [16/16] 0.0, 128
    %v298 = vpop.trf.xlu0
    %v299 = vpop.trf.xlu0
    %v300 = vpop.trf.xlu0
    %v301 = vpop.trf.xlu0
    %v302 = vpop.trf.xlu0
    %v303 = vpop.trf.xlu0
    %v304 = vpop.trf.xlu0
    %v305 = vpop.trf.xlu0
    %v306 = vpop.trf.xlu0
    %v307 = vpop.trf.xlu0
    %v308 = vpop.trf.xlu0
    %v309 = vpop.trf.xlu0
    %v310 = vpop.trf.xlu0
    %v311 = vpop.trf.xlu0
    %v312 = vpop.trf.xlu0
    %v313 = vpop.trf.xlu0
    %v314 = vlaneseq
    %v315 = vshrl.u32 %v314, 7
    %v316 = vsub.s32 0, %v315
    %v317 = vrot.slane %v235, %v316
    %v318 = vmul.f32 %v317, %v45
    %v319 = vmul.f32 %v317, %v46
    %v320 = vmul.f32 %v318, 1.442695
    %v321 = vpow.pop %v320
    %v322 = vmul.f32 %v319, 1.442695
    %v323 = vpow.pop %v322
    %v324 = vlaneseq
    %v325 = vshrl.u32 %v324, 7
    %v326 = vsub.s32 1, %v325
    %v327 = vrot.slane %v235, %v326
    %v328 = vmul.f32 %v327, %v45
    %v329 = vmul.f32 %v327, %v46
    %v330 = vmul.f32 %v328, 1.442695
    %v331 = vpow.pop %v330
    %v332 = vmul.f32 %v329, 1.442695
    %v333 = vpow.pop %v332
    %v334 = vlaneseq
    %v335 = vshrl.u32 %v334, 7
    %v336 = vsub.s32 2, %v335
    %v337 = vrot.slane %v235, %v336
    %v338 = vmul.f32 %v337, %v45
    %v339 = vmul.f32 %v337, %v46
    %v340 = vmul.f32 %v338, 1.442695
    %v341 = vpow.pop %v340
    %v342 = vmul.f32 %v339, 1.442695
    %v343 = vpow.pop %v342
    %v344 = vlaneseq
    %v345 = vshrl.u32 %v344, 7
    %v346 = vsub.s32 3, %v345
    %v347 = vrot.slane %v235, %v346
    %v348 = vmul.f32 %v347, %v45
    %v349 = vmul.f32 %v347, %v46
    %v350 = vmul.f32 %v348, 1.442695
    %v351 = vpow.pop %v350
    %v352 = vmul.f32 %v349, 1.442695
    %v353 = vpow.pop %v352
    %v354 = vlaneseq
    %v355 = vshrl.u32 %v354, 7
    %v356 = vsub.s32 4, %v355
    %v357 = vrot.slane %v235, %v356
    %v358 = vmul.f32 %v357, %v45
    %v359 = vmul.f32 %v357, %v46
    %v360 = vmul.f32 %v358, 1.442695
    %v361 = vpow.pop %v360
    %v362 = vmul.f32 %v359, 1.442695
    %v363 = vpow.pop %v362
    %v364 = vlaneseq
    %v365 = vshrl.u32 %v364, 7
    %v366 = vsub.s32 5, %v365
    %v367 = vrot.slane %v235, %v366
    %v368 = vmul.f32 %v367, %v45
    %v369 = vmul.f32 %v367, %v46
    %v370 = vmul.f32 %v368, 1.442695
    %v371 = vpow.pop %v370
    %v372 = vmul.f32 %v369, 1.442695
    %v373 = vpow.pop %v372
    %v374 = vlaneseq
    %v375 = vshrl.u32 %v374, 7
    %v376 = vsub.s32 6, %v375
    %v377 = vrot.slane %v235, %v376
    %v378 = vmul.f32 %v377, %v45
    %v379 = vmul.f32 %v377, %v46
    %v380 = vmul.f32 %v378, 1.442695
    %v381 = vpow.pop %v380
    %v382 = vmul.f32 %v379, 1.442695
    %v383 = vpow.pop %v382
    %v384 = vlaneseq
    %v385 = vshrl.u32 %v384, 7
    %v386 = vsub.s32 7, %v385
    %v387 = vrot.slane %v235, %v386
    %v388 = vmul.f32 %v387, %v45
    %v389 = vmul.f32 %v387, %v46
    %v390 = vmul.f32 %v388, 1.442695
    %v391 = vpow.pop %v390
    %v392 = vmul.f32 %v389, 1.442695
    %v393 = vpow.pop %v392
    %395 = vset.pattern.permute.xlu0 0
    %396 = vperm.xlu0 %395, %v263
    %v397 = vpop.permute.xlu0 %396
    %400 = vset.pattern.permute.xlu0 0
    %401 = vperm.xlu0 %400, %v264
    %v402 = vpop.permute.xlu0 %401
    %v404 = vlaneseq
    %v405 = vshrl.u32 %v404, 7
    %v406 = vsub.s32 0, %v405
    %v407 = vrot.slane %v236, %v406
    %v408 = vmul.f32 %v397, %v407
    %v409 = vmul.f32 %v402, %v407
    %410 = vset.pattern.permute.xlu0 1
    %411 = vperm.xlu0 %410, %v263
    %v412 = vpop.permute.xlu0 %411
    %414 = vset.pattern.permute.xlu0 1
    %415 = vperm.xlu0 %414, %v264
    %v416 = vpop.permute.xlu0 %415
    %v418 = vlaneseq
    %v419 = vshrl.u32 %v418, 7
    %v420 = vsub.s32 1, %v419
    %v421 = vrot.slane %v236, %v420
    %v422 = vmul.f32 %v412, %v421
    %v423 = vmul.f32 %v416, %v421
    %424 = vset.pattern.permute.xlu0 2
    %425 = vperm.xlu0 %424, %v263
    %v426 = vpop.permute.xlu0 %425
    %428 = vset.pattern.permute.xlu0 2
    %429 = vperm.xlu0 %428, %v264
    %v430 = vpop.permute.xlu0 %429
    %v432 = vlaneseq
    %v433 = vshrl.u32 %v432, 7
    %v434 = vsub.s32 2, %v433
    %v435 = vrot.slane %v236, %v434
    %v436 = vmul.f32 %v426, %v435
    %v437 = vmul.f32 %v430, %v435
    %438 = vset.pattern.permute.xlu0 3
    %439 = vperm.xlu0 %438, %v263
    %v440 = vpop.permute.xlu0 %439
    %442 = vset.pattern.permute.xlu0 3
    %443 = vperm.xlu0 %442, %v264
    %v444 = vpop.permute.xlu0 %443
    %v446 = vlaneseq
    %v447 = vshrl.u32 %v446, 7
    %v448 = vsub.s32 3, %v447
    %v449 = vrot.slane %v236, %v448
    %v450 = vmul.f32 %v440, %v449
    %v451 = vmul.f32 %v444, %v449
    %452 = vset.pattern.permute.xlu0 4
    %453 = vperm.xlu0 %452, %v263
    %v454 = vpop.permute.xlu0 %453
    %456 = vset.pattern.permute.xlu0 4
    %457 = vperm.xlu0 %456, %v264
    %v458 = vpop.permute.xlu0 %457
    %v460 = vlaneseq
    %v461 = vshrl.u32 %v460, 7
    %v462 = vsub.s32 4, %v461
    %v463 = vrot.slane %v236, %v462
    %v464 = vmul.f32 %v454, %v463
    %v465 = vmul.f32 %v458, %v463
    %466 = vset.pattern.permute.xlu0 5
    %467 = vperm.xlu0 %466, %v263
    %v468 = vpop.permute.xlu0 %467
    %470 = vset.pattern.permute.xlu0 5
    %471 = vperm.xlu0 %470, %v264
    %v472 = vpop.permute.xlu0 %471
    %v474 = vlaneseq
    %v475 = vshrl.u32 %v474, 7
    %v476 = vsub.s32 5, %v475
    %v477 = vrot.slane %v236, %v476
    %v478 = vmul.f32 %v468, %v477
    %v479 = vmul.f32 %v472, %v477
    %480 = vset.pattern.permute.xlu0 6
    %481 = vperm.xlu0 %480, %v263
    %v482 = vpop.permute.xlu0 %481
    %484 = vset.pattern.permute.xlu0 6
    %485 = vperm.xlu0 %484, %v264
    %v486 = vpop.permute.xlu0 %485
    %v488 = vlaneseq
    %v489 = vshrl.u32 %v488, 7
    %v490 = vsub.s32 6, %v489
    %v491 = vrot.slane %v236, %v490
    %v492 = vmul.f32 %v482, %v491
    %v493 = vmul.f32 %v486, %v491
    %494 = vset.pattern.permute.xlu0 7
    %495 = vperm.xlu0 %494, %v263
    %v496 = vpop.permute.xlu0 %495
    %498 = vset.pattern.permute.xlu0 7
    %499 = vperm.xlu0 %498, %v264
    %v500 = vpop.permute.xlu0 %499
    %v502 = vlaneseq
    %v503 = vshrl.u32 %v502, 7
    %v504 = vsub.s32 7, %v503
    %v505 = vrot.slane %v236, %v504
    %v506 = vmul.f32 %v496, %v505
    %v507 = vmul.f32 %v500, %v505
    %v508 = vmul.f32 %v321, 0.0
    %v509 = vmul.f32 %v323, 0.0
    %v510 = vadd.f32 %v508, %v408
    %v511 = vadd.f32 %v509, %v409
    %513 = vset.pattern.permute.xlu0 0
    %514 = vperm.xlu0 %513, %v298
    %v515 = vpop.permute.xlu0 %514
    %518 = vset.pattern.permute.xlu0 0
    %519 = vperm.xlu0 %518, %v299
    %v520 = vpop.permute.xlu0 %519
    %v522 = vmul.f32 %v515, %v510
    %v523 = vmul.f32 %v520, %v511
    %vm524 = vcmask 31744
    %v525 = vsel %vm524, %v522, 0.0
    %v526 = vsel %vm524, %v523, 0.0
    %v527 = vadd.f32 %v525, %v526
    %v528 = vrot.slane %v527, 4
    %v529 = vadd.f32 %v527, %v528
    %v530 = vrot.slane %v529, 2
    %v531 = vadd.f32 %v529, %v530
    %v532 = vrot.slane %v531, 1
    %v533 = vadd.f32 %v531, %v532
    %vm534 = vcmask 24576
    %535 = vst.msk [vmem:[#allocation2] sm:$0x1] %vm534, %v533
    %v536 = vmul.f32 %v331, %v510
    %v537 = vmul.f32 %v333, %v511
    %v538 = vadd.f32 %v536, %v422
    %v539 = vadd.f32 %v537, %v423
    %540 = vset.pattern.permute.xlu0 1
    %541 = vperm.xlu0 %540, %v298
    %v542 = vpop.permute.xlu0 %541
    %544 = vset.pattern.permute.xlu0 1
    %545 = vperm.xlu0 %544, %v299
    %v546 = vpop.permute.xlu0 %545
    %v548 = vmul.f32 %v542, %v538
    %v549 = vmul.f32 %v546, %v539
    %v550 = vsel %vm524, %v548, 0.0
    %v551 = vsel %vm524, %v549, 0.0
    %v552 = vadd.f32 %v550, %v551
    %v553 = vrot.slane %v552, 4
    %v554 = vadd.f32 %v552, %v553
    %v555 = vrot.slane %v554, 2
    %v556 = vadd.f32 %v554, %v555
    %v557 = vrot.slane %v556, 1
    %v558 = vadd.f32 %v556, %v557
    %559 = vst.msk [vmem:[#allocation2 + $0x1] sm:$0x1] %vm534, %v558
    %v560 = vmul.f32 %v341, %v538
    %v561 = vmul.f32 %v343, %v539
    %v562 = vadd.f32 %v560, %v436
    %v563 = vadd.f32 %v561, %v437
    %564 = vset.pattern.permute.xlu0 2
    %565 = vperm.xlu0 %564, %v298
    %v566 = vpop.permute.xlu0 %565
    %568 = vset.pattern.permute.xlu0 2
    %569 = vperm.xlu0 %568, %v299
    %v570 = vpop.permute.xlu0 %569
    %v572 = vmul.f32 %v566, %v562
    %v573 = vmul.f32 %v570, %v563
    %v574 = vsel %vm524, %v572, 0.0
    %v575 = vsel %vm524, %v573, 0.0
    %v576 = vadd.f32 %v574, %v575
    %v577 = vrot.slane %v576, 4
    %v578 = vadd.f32 %v576, %v577
    %v579 = vrot.slane %v578, 2
    %v580 = vadd.f32 %v578, %v579
    %v581 = vrot.slane %v580, 1
    %v582 = vadd.f32 %v580, %v581
    %583 = vst.msk [vmem:[#allocation2 + $0x2] sm:$0x1] %vm534, %v582
    %v584 = vmul.f32 %v351, %v562
    %v585 = vmul.f32 %v353, %v563
    %v586 = vadd.f32 %v584, %v450
    %v587 = vadd.f32 %v585, %v451
    %588 = vset.pattern.permute.xlu0 3
    %589 = vperm.xlu0 %588, %v298
    %v590 = vpop.permute.xlu0 %589
    %592 = vset.pattern.permute.xlu0 3
    %593 = vperm.xlu0 %592, %v299
    %v594 = vpop.permute.xlu0 %593
    %v596 = vmul.f32 %v590, %v586
    %v597 = vmul.f32 %v594, %v587
    %v598 = vsel %vm524, %v596, 0.0
    %v599 = vsel %vm524, %v597, 0.0
    %v600 = vadd.f32 %v598, %v599
    %v601 = vrot.slane %v600, 4
    %v602 = vadd.f32 %v600, %v601
    %v603 = vrot.slane %v602, 2
    %v604 = vadd.f32 %v602, %v603
    %v605 = vrot.slane %v604, 1
    %v606 = vadd.f32 %v604, %v605
    %607 = vst.msk [vmem:[#allocation2 + $0x3] sm:$0x1] %vm534, %v606
    %v608 = vmul.f32 %v361, %v586
    %v609 = vmul.f32 %v363, %v587
    %v610 = vadd.f32 %v608, %v464
    %v611 = vadd.f32 %v609, %v465
    %612 = vset.pattern.permute.xlu0 4
    %613 = vperm.xlu0 %612, %v298
    %v614 = vpop.permute.xlu0 %613
    %616 = vset.pattern.permute.xlu0 4
    %617 = vperm.xlu0 %616, %v299
    %v618 = vpop.permute.xlu0 %617
    %v620 = vmul.f32 %v614, %v610
    %v621 = vmul.f32 %v618, %v611
    %v622 = vsel %vm524, %v620, 0.0
    %v623 = vsel %vm524, %v621, 0.0
    %v624 = vadd.f32 %v622, %v623
    %v625 = vrot.slane %v624, 4
    %v626 = vadd.f32 %v624, %v625
    %v627 = vrot.slane %v626, 2
    %v628 = vadd.f32 %v626, %v627
    %v629 = vrot.slane %v628, 1
    %v630 = vadd.f32 %v628, %v629
    %631 = vst.msk [vmem:[#allocation2 + $0x4] sm:$0x1] %vm534, %v630
    %v632 = vmul.f32 %v371, %v610
    %v633 = vmul.f32 %v373, %v611
    %v634 = vadd.f32 %v632, %v478
    %v635 = vadd.f32 %v633, %v479
    %636 = vset.pattern.permute.xlu0 5
    %637 = vperm.xlu0 %636, %v298
    %v638 = vpop.permute.xlu0 %637
    %640 = vset.pattern.permute.xlu0 5
    %641 = vperm.xlu0 %640, %v299
    %v642 = vpop.permute.xlu0 %641
    %v644 = vmul.f32 %v638, %v634
    %v645 = vmul.f32 %v642, %v635
    %v646 = vsel %vm524, %v644, 0.0
    %v647 = vsel %vm524, %v645, 0.0
    %v648 = vadd.f32 %v646, %v647
    %v649 = vrot.slane %v648, 4
    %v650 = vadd.f32 %v648, %v649
    %v651 = vrot.slane %v650, 2
    %v652 = vadd.f32 %v650, %v651
    %v653 = vrot.slane %v652, 1
    %v654 = vadd.f32 %v652, %v653
    %655 = vst.msk [vmem:[#allocation2 + $0x5] sm:$0x1] %vm534, %v654
    %v656 = vmul.f32 %v381, %v634
    %v657 = vmul.f32 %v383, %v635
    %v658 = vadd.f32 %v656, %v492
    %v659 = vadd.f32 %v657, %v493
    %660 = vset.pattern.permute.xlu0 6
    %661 = vperm.xlu0 %660, %v298
    %v662 = vpop.permute.xlu0 %661
    %664 = vset.pattern.permute.xlu0 6
    %665 = vperm.xlu0 %664, %v299
    %v666 = vpop.permute.xlu0 %665
    %v668 = vmul.f32 %v662, %v658
    %v669 = vmul.f32 %v666, %v659
    %v670 = vsel %vm524, %v668, 0.0
    %v671 = vsel %vm524, %v669, 0.0
    %v672 = vadd.f32 %v670, %v671
    %v673 = vrot.slane %v672, 4
    %v674 = vadd.f32 %v672, %v673
    %v675 = vrot.slane %v674, 2
    %v676 = vadd.f32 %v674, %v675
    %v677 = vrot.slane %v676, 1
    %v678 = vadd.f32 %v676, %v677
    %679 = vst.msk [vmem:[#allocation2 + $0x6] sm:$0x1] %vm534, %v678
    %v680 = vmul.f32 %v391, %v658
    %v681 = vmul.f32 %v393, %v659
    %v682 = vadd.f32 %v680, %v506
    %v683 = vadd.f32 %v681, %v507
    %684 = vset.pattern.permute.xlu0 7
    %685 = vperm.xlu0 %684, %v298
    %v686 = vpop.permute.xlu0 %685
    %688 = vset.pattern.permute.xlu0 7
    %689 = vperm.xlu0 %688, %v299
    %v690 = vpop.permute.xlu0 %689
    %v692 = vmul.f32 %v686, %v682
    %v693 = vmul.f32 %v690, %v683
    %v694 = vsel %vm524, %v692, 0.0
    %v695 = vsel %vm524, %v693, 0.0
    %v696 = vadd.f32 %v694, %v695
    %v697 = vrot.slane %v696, 4
    %v698 = vadd.f32 %v696, %v697
    %v699 = vrot.slane %v698, 2
    %v700 = vadd.f32 %v698, %v699
    %v701 = vrot.slane %v700, 1
    %v702 = vadd.f32 %v700, %v701
    %703 = vst.msk [vmem:[#allocation2 + $0x7] sm:$0x1] %vm534, %v702
    %v704 = vld [vmem:[#allocation2] sm:$0xff]
    %v705 = vadd.f32 %v704, %v243
    %v706 = vsub.f32 0.0, %v102
    %v707 = vmul.f32 %v706, 1.442695
    %v708 = vpow.pop %v707
    %v709 = vadd.f32 %v708, 1.0
    %v710 = vrcp.pop %v709
    %v711 = vmul.f32 %v102, %v710
    %713 = vrot.lane.b32.xlu0 %v711, 124
    %v714 = vpop.permute.xlu0 %713
    %v716 = vmul.f32 %v705, %v714
    %718 = vset.pattern.permute.xlu0 0
    %719 = vperm.xlu0 %718, %v716
    %v720 = vpop.permute.xlu0 %719
    %v722 = vlaneseq
    %v723 = vshrl.u32 %v722, 7
    %v724 = vsub.s32 0, %v723
    %v725 = vrot.slane %v48, %v724
    %v726 = vmul.f32 %v720, %v725
    %727 = vset.pattern.permute.xlu0 1
    %728 = vperm.xlu0 %727, %v716
    %v729 = vpop.permute.xlu0 %728
    %v731 = vlaneseq
    %v732 = vshrl.u32 %v731, 7
    %v733 = vsub.s32 1, %v732
    %v734 = vrot.slane %v48, %v733
    %v735 = vmul.f32 %v729, %v734
    %v736 = vadd.f32 %v726, %v735
    %737 = vset.pattern.permute.xlu0 2
    %738 = vperm.xlu0 %737, %v716
    %v739 = vpop.permute.xlu0 %738
    %v741 = vlaneseq
    %v742 = vshrl.u32 %v741, 7
    %v743 = vsub.s32 2, %v742
    %v744 = vrot.slane %v48, %v743
    %v745 = vmul.f32 %v739, %v744
    %v746 = vadd.f32 %v736, %v745
    %747 = vset.pattern.permute.xlu0 3
    %748 = vperm.xlu0 %747, %v716
    %v749 = vpop.permute.xlu0 %748
    %v751 = vlaneseq
    %v752 = vshrl.u32 %v751, 7
    %v753 = vsub.s32 3, %v752
    %v754 = vrot.slane %v48, %v753
    %v755 = vmul.f32 %v749, %v754
    %v756 = vadd.f32 %v746, %v755
    %v758 = vlaneseq
    %v759 = vshrl.u32 %v758, 7
    %v760 = vsub.s32 0, %v759
    %v761 = vrot.slane %v49, %v760
    %v763 = vadd.f32 %v756, %v761
    %764 = vxpose.xlu0.b32.start [1/16] %v763, 128
    %765 = vxpose.xlu0.b32.cont [2/16] 0.0, 128
    %766 = vxpose.xlu0.b32.cont [3/16] 0.0, 128
    %767 = vxpose.xlu0.b32.cont [4/16] 0.0, 128
    %768 = vxpose.xlu0.b32.cont [5/16] 0.0, 128
    %769 = vxpose.xlu0.b32.cont [6/16] 0.0, 128
    %770 = vxpose.xlu0.b32.cont [7/16] 0.0, 128
    %771 = vxpose.xlu0.b32.cont [8/16] 0.0, 128
    %772 = vxpose.xlu0.b32.cont [9/16] 0.0, 128
    %773 = vxpose.xlu0.b32.cont [10/16] 0.0, 128
    %774 = vxpose.xlu0.b32.cont [11/16] 0.0, 128
    %775 = vxpose.xlu0.b32.cont [12/16] 0.0, 128
    %776 = vxpose.xlu0.b32.cont [13/16] 0.0, 128
    %777 = vxpose.xlu0.b32.cont [14/16] 0.0, 128
    %778 = vxpose.xlu0.b32.cont [15/16] 0.0, 128
    %779 = vxpose.xlu0.b32.end [16/16] 0.0, 128
    %v780 = vpop.trf.xlu0
    %v781 = vpop.trf.xlu0
    %v782 = vpop.trf.xlu0
    %v783 = vpop.trf.xlu0
    %v784 = vpop.trf.xlu0
    %v785 = vpop.trf.xlu0
    %v786 = vpop.trf.xlu0
    %v787 = vpop.trf.xlu0
    %v788 = vpop.trf.xlu0
    %v789 = vpop.trf.xlu0
    %v790 = vpop.trf.xlu0
    %v791 = vpop.trf.xlu0
    %v792 = vpop.trf.xlu0
    %v793 = vpop.trf.xlu0
    %v794 = vpop.trf.xlu0
    %v795 = vpop.trf.xlu0
    %vm796 = vcmask 58368
    %797 = vst.msk [vmem:[#allocation3] sm:$0x3] %vm796, %v780
    %s798 = scalar_lea.vmem %s0, 2
    %v799 = vld [vmem:[%s798] sm:$0x3]
    %800 = vxpose.xlu0.b32.start [1/16] %v799, 128
    %801 = vxpose.xlu0.b32.cont [2/16] 0.0, 128
    %802 = vxpose.xlu0.b32.cont [3/16] 0.0, 128
    %803 = vxpose.xlu0.b32.cont [4/16] 0.0, 128
    %804 = vxpose.xlu0.b32.cont [5/16] 0.0, 128
    %805 = vxpose.xlu0.b32.cont [6/16] 0.0, 128
    %806 = vxpose.xlu0.b32.cont [7/16] 0.0, 128
    %807 = vxpose.xlu0.b32.cont [8/16] 0.0, 128
    %808 = vxpose.xlu0.b32.cont [9/16] 0.0, 128
    %809 = vxpose.xlu0.b32.cont [10/16] 0.0, 128
    %810 = vxpose.xlu0.b32.cont [11/16] 0.0, 128
    %811 = vxpose.xlu0.b32.cont [12/16] 0.0, 128
    %812 = vxpose.xlu0.b32.cont [13/16] 0.0, 128
    %813 = vxpose.xlu0.b32.cont [14/16] 0.0, 128
    %814 = vxpose.xlu0.b32.cont [15/16] 0.0, 128
    %815 = vxpose.xlu0.b32.end [16/16] 0.0, 128
    %v816 = vpop.trf.xlu0
    %v817 = vpop.trf.xlu0
    %v818 = vpop.trf.xlu0
    %v819 = vpop.trf.xlu0
    %v820 = vpop.trf.xlu0
    %v821 = vpop.trf.xlu0
    %v822 = vpop.trf.xlu0
    %v823 = vpop.trf.xlu0
    %v824 = vpop.trf.xlu0
    %v825 = vpop.trf.xlu0
    %v826 = vpop.trf.xlu0
    %v827 = vpop.trf.xlu0
    %v828 = vpop.trf.xlu0
    %v829 = vpop.trf.xlu0
    %v830 = vpop.trf.xlu0
    %v831 = vpop.trf.xlu0
    %833 = vset.pattern.permute.xlu0 0
    %834 = vperm.xlu0 %833, %v816
    %v835 = vpop.permute.xlu0 %834
    %v837 = vmul.f32 %v835, %v91
    %838 = vset.pattern.permute.xlu0 1
    %839 = vperm.xlu0 %838, %v816
    %v840 = vpop.permute.xlu0 %839
    %v842 = vmul.f32 %v840, %v100
    %v843 = vadd.f32 %v837, %v842
    %v845 = vrot.slane %v843, 5
    %v847 = vsel %vm106, 0.0, %v845
    %v848 = vmul.f32 %v847, %v111
    %v849 = vadd.f32 %v117, %v848
    %v850 = vmul.f32 %v847, %v123
    %v851 = vmul.f32 %v845, %v123
    %v854 = vrot.slane %v850, 1
    %v855 = vrot.slane %v851, 1
    %v856 = vsel %vm128, %v854, %v855
    %v858 = vadd.f32 %v849, %v856
    %v859 = vmul.f32 %v847, %v137
    %v860 = vmul.f32 %v845, %v137
    %v863 = vrot.slane %v859, 2
    %v864 = vrot.slane %v860, 2
    %v865 = vsel %vm142, %v863, %v864
    %v867 = vadd.f32 %v858, %v865
    %v868 = vmul.f32 %v847, %v151
    %v869 = vmul.f32 %v845, %v151
    %v872 = vrot.slane %v868, 3
    %v873 = vrot.slane %v869, 3
    %v874 = vsel %vm156, %v872, %v873
    %v876 = vadd.f32 %v867, %v874
    %v877 = vsub.f32 0.0, %v876
    %v878 = vmul.f32 %v877, 1.442695
    %v879 = vpow.pop %v878
    %v880 = vadd.f32 %v879, 1.0
    %v881 = vrcp.pop %v880
    %v882 = vmul.f32 %v876, %v881
    %884 = vset.pattern.permute.xlu0 0
    %885 = vperm.xlu0 %884, %v882
    %v886 = vpop.permute.xlu0 %885
    %v888 = vmul.f32 %v886, %v176
    %889 = vset.pattern.permute.xlu0 1
    %890 = vperm.xlu0 %889, %v882
    %v891 = vpop.permute.xlu0 %890
    %v893 = vmul.f32 %v891, %v185
    %v894 = vadd.f32 %v888, %v893
    %895 = vset.pattern.permute.xlu0 2
    %896 = vperm.xlu0 %895, %v882
    %v897 = vpop.permute.xlu0 %896
    %v899 = vmul.f32 %v897, %v195
    %v900 = vadd.f32 %v894, %v899
    %901 = vset.pattern.permute.xlu0 3
    %902 = vperm.xlu0 %901, %v882
    %v903 = vpop.permute.xlu0 %902
    %v905 = vmul.f32 %v903, %v205
    %v906 = vadd.f32 %v900, %v905
    %908 = vset.pattern.permute.xlu0 0
    %909 = vperm.xlu0 %908, %v906
    %v910 = vpop.permute.xlu0 %909
    %v912 = vmul.f32 %v910, %v217
    %v913 = vadd.f32 %v912, %v224
    %v914 = vmax.f32 %v913, 0.0
    %v915 = vand.u32 2147483647, %v913
    %v916 = vsub.f32 0.0, %v915
    %v917 = vmul.f32 %v916, 1.442695
    %v918 = vpow.pop %v917
    %v919 = vadd.f32 %v918, 1.0
    %v920 = vlog2.pop %v919
    %v921 = vmul.f32 %v920, 0.6931472
    %v922 = vadd.f32 %v914, %v921
    %v923 = vmul.f32 %v922, %v882
    %v924 = vmul.f32 %v882, %v241
    %925 = vrot.lane.b32.xlu0 %v906, 127
    %v926 = vpop.permute.xlu0 %925
    %928 = vxpose.xlu0.b32.start [1/16] %v926, 128
    %929 = vxpose.xlu0.b32.cont [2/16] 0.0, 128
    %930 = vxpose.xlu0.b32.cont [3/16] 0.0, 128
    %931 = vxpose.xlu0.b32.cont [4/16] 0.0, 128
    %932 = vxpose.xlu0.b32.cont [5/16] 0.0, 128
    %933 = vxpose.xlu0.b32.cont [6/16] 0.0, 128
    %934 = vxpose.xlu0.b32.cont [7/16] 0.0, 128
    %935 = vxpose.xlu0.b32.cont [8/16] 0.0, 128
    %936 = vxpose.xlu0.b32.cont [9/16] 0.0, 128
    %937 = vxpose.xlu0.b32.cont [10/16] 0.0, 128
    %938 = vxpose.xlu0.b32.cont [11/16] 0.0, 128
    %939 = vxpose.xlu0.b32.cont [12/16] 0.0, 128
    %940 = vxpose.xlu0.b32.cont [13/16] 0.0, 128
    %941 = vxpose.xlu0.b32.cont [14/16] 0.0, 128
    %942 = vxpose.xlu0.b32.cont [15/16] 0.0, 128
    %943 = vxpose.xlu0.b32.end [16/16] 0.0, 128
    %v944 = vpop.trf.xlu0
    %v945 = vpop.trf.xlu0
    %v946 = vpop.trf.xlu0
    %v947 = vpop.trf.xlu0
    %v948 = vpop.trf.xlu0
    %v949 = vpop.trf.xlu0
    %v950 = vpop.trf.xlu0
    %v951 = vpop.trf.xlu0
    %v952 = vpop.trf.xlu0
    %v953 = vpop.trf.xlu0
    %v954 = vpop.trf.xlu0
    %v955 = vpop.trf.xlu0
    %v956 = vpop.trf.xlu0
    %v957 = vpop.trf.xlu0
    %v958 = vpop.trf.xlu0
    %v959 = vpop.trf.xlu0
    %960 = vrot.lane.b32.xlu0 %v906, 111
    %v961 = vpop.permute.xlu0 %960
    %963 = vxpose.xlu0.b32.start [1/16] %v961, 128
    %964 = vxpose.xlu0.b32.cont [2/16] 0.0, 128
    %965 = vxpose.xlu0.b32.cont [3/16] 0.0, 128
    %966 = vxpose.xlu0.b32.cont [4/16] 0.0, 128
    %967 = vxpose.xlu0.b32.cont [5/16] 0.0, 128
    %968 = vxpose.xlu0.b32.cont [6/16] 0.0, 128
    %969 = vxpose.xlu0.b32.cont [7/16] 0.0, 128
    %970 = vxpose.xlu0.b32.cont [8/16] 0.0, 128
    %971 = vxpose.xlu0.b32.cont [9/16] 0.0, 128
    %972 = vxpose.xlu0.b32.cont [10/16] 0.0, 128
    %973 = vxpose.xlu0.b32.cont [11/16] 0.0, 128
    %974 = vxpose.xlu0.b32.cont [12/16] 0.0, 128
    %975 = vxpose.xlu0.b32.cont [13/16] 0.0, 128
    %976 = vxpose.xlu0.b32.cont [14/16] 0.0, 128
    %977 = vxpose.xlu0.b32.cont [15/16] 0.0, 128
    %978 = vxpose.xlu0.b32.end [16/16] 0.0, 128
    %v979 = vpop.trf.xlu0
    %v980 = vpop.trf.xlu0
    %v981 = vpop.trf.xlu0
    %v982 = vpop.trf.xlu0
    %v983 = vpop.trf.xlu0
    %v984 = vpop.trf.xlu0
    %v985 = vpop.trf.xlu0
    %v986 = vpop.trf.xlu0
    %v987 = vpop.trf.xlu0
    %v988 = vpop.trf.xlu0
    %v989 = vpop.trf.xlu0
    %v990 = vpop.trf.xlu0
    %v991 = vpop.trf.xlu0
    %v992 = vpop.trf.xlu0
    %v993 = vpop.trf.xlu0
    %v994 = vpop.trf.xlu0
    %v995 = vlaneseq
    %v996 = vshrl.u32 %v995, 7
    %v997 = vsub.s32 0, %v996
    %v998 = vrot.slane %v922, %v997
    %v999 = vmul.f32 %v998, %v45
    %v1000 = vmul.f32 %v998, %v46
    %v1001 = vmul.f32 %v999, 1.442695
    %v1002 = vpow.pop %v1001
    %v1003 = vmul.f32 %v1000, 1.442695
    %v1004 = vpow.pop %v1003
    %v1005 = vlaneseq
    %v1006 = vshrl.u32 %v1005, 7
    %v1007 = vsub.s32 1, %v1006
    %v1008 = vrot.slane %v922, %v1007
    %v1009 = vmul.f32 %v1008, %v45
    %v1010 = vmul.f32 %v1008, %v46
    %v1011 = vmul.f32 %v1009, 1.442695
    %v1012 = vpow.pop %v1011
    %v1013 = vmul.f32 %v1010, 1.442695
    %v1014 = vpow.pop %v1013
    %v1015 = vlaneseq
    %v1016 = vshrl.u32 %v1015, 7
    %v1017 = vsub.s32 2, %v1016
    %v1018 = vrot.slane %v922, %v1017
    %v1019 = vmul.f32 %v1018, %v45
    %v1020 = vmul.f32 %v1018, %v46
    %v1021 = vmul.f32 %v1019, 1.442695
    %v1022 = vpow.pop %v1021
    %v1023 = vmul.f32 %v1020, 1.442695
    %v1024 = vpow.pop %v1023
    %v1025 = vlaneseq
    %v1026 = vshrl.u32 %v1025, 7
    %v1027 = vsub.s32 3, %v1026
    %v1028 = vrot.slane %v922, %v1027
    %v1029 = vmul.f32 %v1028, %v45
    %v1030 = vmul.f32 %v1028, %v46
    %v1031 = vmul.f32 %v1029, 1.442695
    %v1032 = vpow.pop %v1031
    %v1033 = vmul.f32 %v1030, 1.442695
    %v1034 = vpow.pop %v1033
    %v1035 = vlaneseq
    %v1036 = vshrl.u32 %v1035, 7
    %v1037 = vsub.s32 4, %v1036
    %v1038 = vrot.slane %v922, %v1037
    %v1039 = vmul.f32 %v1038, %v45
    %v1040 = vmul.f32 %v1038, %v46
    %v1041 = vmul.f32 %v1039, 1.442695
    %v1042 = vpow.pop %v1041
    %v1043 = vmul.f32 %v1040, 1.442695
    %v1044 = vpow.pop %v1043
    %v1045 = vlaneseq
    %v1046 = vshrl.u32 %v1045, 7
    %v1047 = vsub.s32 5, %v1046
    %v1048 = vrot.slane %v922, %v1047
    %v1049 = vmul.f32 %v1048, %v45
    %v1050 = vmul.f32 %v1048, %v46
    %v1051 = vmul.f32 %v1049, 1.442695
    %v1052 = vpow.pop %v1051
    %v1053 = vmul.f32 %v1050, 1.442695
    %v1054 = vpow.pop %v1053
    %v1055 = vlaneseq
    %v1056 = vshrl.u32 %v1055, 7
    %v1057 = vsub.s32 6, %v1056
    %v1058 = vrot.slane %v922, %v1057
    %v1059 = vmul.f32 %v1058, %v45
    %v1060 = vmul.f32 %v1058, %v46
    %v1061 = vmul.f32 %v1059, 1.442695
    %v1062 = vpow.pop %v1061
    %v1063 = vmul.f32 %v1060, 1.442695
    %v1064 = vpow.pop %v1063
    %v1065 = vlaneseq
    %v1066 = vshrl.u32 %v1065, 7
    %v1067 = vsub.s32 7, %v1066
    %v1068 = vrot.slane %v922, %v1067
    %v1069 = vmul.f32 %v1068, %v45
    %v1070 = vmul.f32 %v1068, %v46
    %v1071 = vmul.f32 %v1069, 1.442695
    %v1072 = vpow.pop %v1071
    %v1073 = vmul.f32 %v1070, 1.442695
    %v1074 = vpow.pop %v1073
    %1076 = vset.pattern.permute.xlu0 0
    %1077 = vperm.xlu0 %1076, %v944
    %v1078 = vpop.permute.xlu0 %1077
    %1081 = vset.pattern.permute.xlu0 0
    %1082 = vperm.xlu0 %1081, %v945
    %v1083 = vpop.permute.xlu0 %1082
    %v1085 = vlaneseq
    %v1086 = vshrl.u32 %v1085, 7
    %v1087 = vsub.s32 0, %v1086
    %v1088 = vrot.slane %v923, %v1087
    %v1089 = vmul.f32 %v1078, %v1088
    %v1090 = vmul.f32 %v1083, %v1088
    %1091 = vset.pattern.permute.xlu0 1
    %1092 = vperm.xlu0 %1091, %v944
    %v1093 = vpop.permute.xlu0 %1092
    %1095 = vset.pattern.permute.xlu0 1
    %1096 = vperm.xlu0 %1095, %v945
    %v1097 = vpop.permute.xlu0 %1096
    %v1099 = vlaneseq
    %v1100 = vshrl.u32 %v1099, 7
    %v1101 = vsub.s32 1, %v1100
    %v1102 = vrot.slane %v923, %v1101
    %v1103 = vmul.f32 %v1093, %v1102
    %v1104 = vmul.f32 %v1097, %v1102
    %1105 = vset.pattern.permute.xlu0 2
    %1106 = vperm.xlu0 %1105, %v944
    %v1107 = vpop.permute.xlu0 %1106
    %1109 = vset.pattern.permute.xlu0 2
    %1110 = vperm.xlu0 %1109, %v945
    %v1111 = vpop.permute.xlu0 %1110
    %v1113 = vlaneseq
    %v1114 = vshrl.u32 %v1113, 7
    %v1115 = vsub.s32 2, %v1114
    %v1116 = vrot.slane %v923, %v1115
    %v1117 = vmul.f32 %v1107, %v1116
    %v1118 = vmul.f32 %v1111, %v1116
    %1119 = vset.pattern.permute.xlu0 3
    %1120 = vperm.xlu0 %1119, %v944
    %v1121 = vpop.permute.xlu0 %1120
    %1123 = vset.pattern.permute.xlu0 3
    %1124 = vperm.xlu0 %1123, %v945
    %v1125 = vpop.permute.xlu0 %1124
    %v1127 = vlaneseq
    %v1128 = vshrl.u32 %v1127, 7
    %v1129 = vsub.s32 3, %v1128
    %v1130 = vrot.slane %v923, %v1129
    %v1131 = vmul.f32 %v1121, %v1130
    %v1132 = vmul.f32 %v1125, %v1130
    %1133 = vset.pattern.permute.xlu0 4
    %1134 = vperm.xlu0 %1133, %v944
    %v1135 = vpop.permute.xlu0 %1134
    %1137 = vset.pattern.permute.xlu0 4
    %1138 = vperm.xlu0 %1137, %v945
    %v1139 = vpop.permute.xlu0 %1138
    %v1141 = vlaneseq
    %v1142 = vshrl.u32 %v1141, 7
    %v1143 = vsub.s32 4, %v1142
    %v1144 = vrot.slane %v923, %v1143
    %v1145 = vmul.f32 %v1135, %v1144
    %v1146 = vmul.f32 %v1139, %v1144
    %1147 = vset.pattern.permute.xlu0 5
    %1148 = vperm.xlu0 %1147, %v944
    %v1149 = vpop.permute.xlu0 %1148
    %1151 = vset.pattern.permute.xlu0 5
    %1152 = vperm.xlu0 %1151, %v945
    %v1153 = vpop.permute.xlu0 %1152
    %v1155 = vlaneseq
    %v1156 = vshrl.u32 %v1155, 7
    %v1157 = vsub.s32 5, %v1156
    %v1158 = vrot.slane %v923, %v1157
    %v1159 = vmul.f32 %v1149, %v1158
    %v1160 = vmul.f32 %v1153, %v1158
    %1161 = vset.pattern.permute.xlu0 6
    %1162 = vperm.xlu0 %1161, %v944
    %v1163 = vpop.permute.xlu0 %1162
    %1165 = vset.pattern.permute.xlu0 6
    %1166 = vperm.xlu0 %1165, %v945
    %v1167 = vpop.permute.xlu0 %1166
    %v1169 = vlaneseq
    %v1170 = vshrl.u32 %v1169, 7
    %v1171 = vsub.s32 6, %v1170
    %v1172 = vrot.slane %v923, %v1171
    %v1173 = vmul.f32 %v1163, %v1172
    %v1174 = vmul.f32 %v1167, %v1172
    %1175 = vset.pattern.permute.xlu0 7
    %1176 = vperm.xlu0 %1175, %v944
    %v1177 = vpop.permute.xlu0 %1176
    %1179 = vset.pattern.permute.xlu0 7
    %1180 = vperm.xlu0 %1179, %v945
    %v1181 = vpop.permute.xlu0 %1180
    %v1183 = vlaneseq
    %v1184 = vshrl.u32 %v1183, 7
    %v1185 = vsub.s32 7, %v1184
    %v1186 = vrot.slane %v923, %v1185
    %v1187 = vmul.f32 %v1177, %v1186
    %v1188 = vmul.f32 %v1181, %v1186
    %v1189 = vmul.f32 %v1002, 0.0
    %v1190 = vmul.f32 %v1004, 0.0
    %v1191 = vadd.f32 %v1189, %v1089
    %v1192 = vadd.f32 %v1190, %v1090
    %1194 = vset.pattern.permute.xlu0 0
    %1195 = vperm.xlu0 %1194, %v979
    %v1196 = vpop.permute.xlu0 %1195
    %1199 = vset.pattern.permute.xlu0 0
    %1200 = vperm.xlu0 %1199, %v980
    %v1201 = vpop.permute.xlu0 %1200
    %v1203 = vmul.f32 %v1196, %v1191
    %v1204 = vmul.f32 %v1201, %v1192
    %v1205 = vsel %vm524, %v1203, 0.0
    %v1206 = vsel %vm524, %v1204, 0.0
    %v1207 = vadd.f32 %v1205, %v1206
    %v1208 = vrot.slane %v1207, 4
    %v1209 = vadd.f32 %v1207, %v1208
    %v1210 = vrot.slane %v1209, 2
    %v1211 = vadd.f32 %v1209, %v1210
    %v1212 = vrot.slane %v1211, 1
    %v1213 = vadd.f32 %v1211, %v1212
    %1214 = vst.msk [vmem:[#allocation2] sm:$0x1] %vm534, %v1213
    %v1215 = vmul.f32 %v1012, %v1191
    %v1216 = vmul.f32 %v1014, %v1192
    %v1217 = vadd.f32 %v1215, %v1103
    %v1218 = vadd.f32 %v1216, %v1104
    %1219 = vset.pattern.permute.xlu0 1
    %1220 = vperm.xlu0 %1219, %v979
    %v1221 = vpop.permute.xlu0 %1220
    %1223 = vset.pattern.permute.xlu0 1
    %1224 = vperm.xlu0 %1223, %v980
    %v1225 = vpop.permute.xlu0 %1224
    %v1227 = vmul.f32 %v1221, %v1217
    %v1228 = vmul.f32 %v1225, %v1218
    %v1229 = vsel %vm524, %v1227, 0.0
    %v1230 = vsel %vm524, %v1228, 0.0
    %v1231 = vadd.f32 %v1229, %v1230
    %v1232 = vrot.slane %v1231, 4
    %v1233 = vadd.f32 %v1231, %v1232
    %v1234 = vrot.slane %v1233, 2
    %v1235 = vadd.f32 %v1233, %v1234
    %v1236 = vrot.slane %v1235, 1
    %v1237 = vadd.f32 %v1235, %v1236
    %1238 = vst.msk [vmem:[#allocation2 + $0x1] sm:$0x1] %vm534, %v1237
    %v1239 = vmul.f32 %v1022, %v1217
    %v1240 = vmul.f32 %v1024, %v1218
    %v1241 = vadd.f32 %v1239, %v1117
    %v1242 = vadd.f32 %v1240, %v1118
    %1243 = vset.pattern.permute.xlu0 2
    %1244 = vperm.xlu0 %1243, %v979
    %v1245 = vpop.permute.xlu0 %1244
    %1247 = vset.pattern.permute.xlu0 2
    %1248 = vperm.xlu0 %1247, %v980
    %v1249 = vpop.permute.xlu0 %1248
    %v1251 = vmul.f32 %v1245, %v1241
    %v1252 = vmul.f32 %v1249, %v1242
    %v1253 = vsel %vm524, %v1251, 0.0
    %v1254 = vsel %vm524, %v1252, 0.0
    %v1255 = vadd.f32 %v1253, %v1254
    %v1256 = vrot.slane %v1255, 4
    %v1257 = vadd.f32 %v1255, %v1256
    %v1258 = vrot.slane %v1257, 2
    %v1259 = vadd.f32 %v1257, %v1258
    %v1260 = vrot.slane %v1259, 1
    %v1261 = vadd.f32 %v1259, %v1260
    %1262 = vst.msk [vmem:[#allocation2 + $0x2] sm:$0x1] %vm534, %v1261
    %v1263 = vmul.f32 %v1032, %v1241
    %v1264 = vmul.f32 %v1034, %v1242
    %v1265 = vadd.f32 %v1263, %v1131
    %v1266 = vadd.f32 %v1264, %v1132
    %1267 = vset.pattern.permute.xlu0 3
    %1268 = vperm.xlu0 %1267, %v979
    %v1269 = vpop.permute.xlu0 %1268
    %1271 = vset.pattern.permute.xlu0 3
    %1272 = vperm.xlu0 %1271, %v980
    %v1273 = vpop.permute.xlu0 %1272
    %v1275 = vmul.f32 %v1269, %v1265
    %v1276 = vmul.f32 %v1273, %v1266
    %v1277 = vsel %vm524, %v1275, 0.0
    %v1278 = vsel %vm524, %v1276, 0.0
    %v1279 = vadd.f32 %v1277, %v1278
    %v1280 = vrot.slane %v1279, 4
    %v1281 = vadd.f32 %v1279, %v1280
    %v1282 = vrot.slane %v1281, 2
    %v1283 = vadd.f32 %v1281, %v1282
    %v1284 = vrot.slane %v1283, 1
    %v1285 = vadd.f32 %v1283, %v1284
    %1286 = vst.msk [vmem:[#allocation2 + $0x3] sm:$0x1] %vm534, %v1285
    %v1287 = vmul.f32 %v1042, %v1265
    %v1288 = vmul.f32 %v1044, %v1266
    %v1289 = vadd.f32 %v1287, %v1145
    %v1290 = vadd.f32 %v1288, %v1146
    %1291 = vset.pattern.permute.xlu0 4
    %1292 = vperm.xlu0 %1291, %v979
    %v1293 = vpop.permute.xlu0 %1292
    %1295 = vset.pattern.permute.xlu0 4
    %1296 = vperm.xlu0 %1295, %v980
    %v1297 = vpop.permute.xlu0 %1296
    %v1299 = vmul.f32 %v1293, %v1289
    %v1300 = vmul.f32 %v1297, %v1290
    %v1301 = vsel %vm524, %v1299, 0.0
    %v1302 = vsel %vm524, %v1300, 0.0
    %v1303 = vadd.f32 %v1301, %v1302
    %v1304 = vrot.slane %v1303, 4
    %v1305 = vadd.f32 %v1303, %v1304
    %v1306 = vrot.slane %v1305, 2
    %v1307 = vadd.f32 %v1305, %v1306
    %v1308 = vrot.slane %v1307, 1
    %v1309 = vadd.f32 %v1307, %v1308
    %1310 = vst.msk [vmem:[#allocation2 + $0x4] sm:$0x1] %vm534, %v1309
    %v1311 = vmul.f32 %v1052, %v1289
    %v1312 = vmul.f32 %v1054, %v1290
    %v1313 = vadd.f32 %v1311, %v1159
    %v1314 = vadd.f32 %v1312, %v1160
    %1315 = vset.pattern.permute.xlu0 5
    %1316 = vperm.xlu0 %1315, %v979
    %v1317 = vpop.permute.xlu0 %1316
    %1319 = vset.pattern.permute.xlu0 5
    %1320 = vperm.xlu0 %1319, %v980
    %v1321 = vpop.permute.xlu0 %1320
    %v1323 = vmul.f32 %v1317, %v1313
    %v1324 = vmul.f32 %v1321, %v1314
    %v1325 = vsel %vm524, %v1323, 0.0
    %v1326 = vsel %vm524, %v1324, 0.0
    %v1327 = vadd.f32 %v1325, %v1326
    %v1328 = vrot.slane %v1327, 4
    %v1329 = vadd.f32 %v1327, %v1328
    %v1330 = vrot.slane %v1329, 2
    %v1331 = vadd.f32 %v1329, %v1330
    %v1332 = vrot.slane %v1331, 1
    %v1333 = vadd.f32 %v1331, %v1332
    %1334 = vst.msk [vmem:[#allocation2 + $0x5] sm:$0x1] %vm534, %v1333
    %v1335 = vmul.f32 %v1062, %v1313
    %v1336 = vmul.f32 %v1064, %v1314
    %v1337 = vadd.f32 %v1335, %v1173
    %v1338 = vadd.f32 %v1336, %v1174
    %1339 = vset.pattern.permute.xlu0 6
    %1340 = vperm.xlu0 %1339, %v979
    %v1341 = vpop.permute.xlu0 %1340
    %1343 = vset.pattern.permute.xlu0 6
    %1344 = vperm.xlu0 %1343, %v980
    %v1345 = vpop.permute.xlu0 %1344
    %v1347 = vmul.f32 %v1341, %v1337
    %v1348 = vmul.f32 %v1345, %v1338
    %v1349 = vsel %vm524, %v1347, 0.0
    %v1350 = vsel %vm524, %v1348, 0.0
    %v1351 = vadd.f32 %v1349, %v1350
    %v1352 = vrot.slane %v1351, 4
    %v1353 = vadd.f32 %v1351, %v1352
    %v1354 = vrot.slane %v1353, 2
    %v1355 = vadd.f32 %v1353, %v1354
    %v1356 = vrot.slane %v1355, 1
    %v1357 = vadd.f32 %v1355, %v1356
    %1358 = vst.msk [vmem:[#allocation2 + $0x6] sm:$0x1] %vm534, %v1357
    %v1359 = vmul.f32 %v1072, %v1337
    %v1360 = vmul.f32 %v1074, %v1338
    %v1361 = vadd.f32 %v1359, %v1187
    %v1362 = vadd.f32 %v1360, %v1188
    %1363 = vset.pattern.permute.xlu0 7
    %1364 = vperm.xlu0 %1363, %v979
    %v1365 = vpop.permute.xlu0 %1364
    %1367 = vset.pattern.permute.xlu0 7
    %1368 = vperm.xlu0 %1367, %v980
    %v1369 = vpop.permute.xlu0 %1368
    %v1371 = vmul.f32 %v1365, %v1361
    %v1372 = vmul.f32 %v1369, %v1362
    %v1373 = vsel %vm524, %v1371, 0.0
    %v1374 = vsel %vm524, %v1372, 0.0
    %v1375 = vadd.f32 %v1373, %v1374
    %v1376 = vrot.slane %v1375, 4
    %v1377 = vadd.f32 %v1375, %v1376
    %v1378 = vrot.slane %v1377, 2
    %v1379 = vadd.f32 %v1377, %v1378
    %v1380 = vrot.slane %v1379, 1
    %v1381 = vadd.f32 %v1379, %v1380
    %1382 = vst.msk [vmem:[#allocation2 + $0x7] sm:$0x1] %vm534, %v1381
    %v1383 = vld [vmem:[#allocation2] sm:$0xff]
    %v1384 = vadd.f32 %v1383, %v924
    %v1385 = vsub.f32 0.0, %v843
    %v1386 = vmul.f32 %v1385, 1.442695
    %v1387 = vpow.pop %v1386
    %v1388 = vadd.f32 %v1387, 1.0
    %v1389 = vrcp.pop %v1388
    %v1390 = vmul.f32 %v843, %v1389
    %1392 = vrot.lane.b32.xlu0 %v1390, 124
    %v1393 = vpop.permute.xlu0 %1392
    %v1395 = vmul.f32 %v1384, %v1393
    %1397 = vset.pattern.permute.xlu0 0
    %1398 = vperm.xlu0 %1397, %v1395
    %v1399 = vpop.permute.xlu0 %1398
    %v1401 = vmul.f32 %v1399, %v725
    %1402 = vset.pattern.permute.xlu0 1
    %1403 = vperm.xlu0 %1402, %v1395
    %v1404 = vpop.permute.xlu0 %1403
    %v1406 = vmul.f32 %v1404, %v734
    %v1407 = vadd.f32 %v1401, %v1406
    %1408 = vset.pattern.permute.xlu0 2
    %1409 = vperm.xlu0 %1408, %v1395
    %v1410 = vpop.permute.xlu0 %1409
    %v1412 = vmul.f32 %v1410, %v744
    %v1413 = vadd.f32 %v1407, %v1412
    %1414 = vset.pattern.permute.xlu0 3
    %1415 = vperm.xlu0 %1414, %v1395
    %v1416 = vpop.permute.xlu0 %1415
    %v1418 = vmul.f32 %v1416, %v754
    %v1419 = vadd.f32 %v1413, %v1418
    %v1420 = vadd.f32 %v1419, %v761
    %1421 = vxpose.xlu0.b32.start [1/16] %v1420, 128
    %1422 = vxpose.xlu0.b32.cont [2/16] 0.0, 128
    %1423 = vxpose.xlu0.b32.cont [3/16] 0.0, 128
    %1424 = vxpose.xlu0.b32.cont [4/16] 0.0, 128
    %1425 = vxpose.xlu0.b32.cont [5/16] 0.0, 128
    %1426 = vxpose.xlu0.b32.cont [6/16] 0.0, 128
    %1427 = vxpose.xlu0.b32.cont [7/16] 0.0, 128
    %1428 = vxpose.xlu0.b32.cont [8/16] 0.0, 128
    %1429 = vxpose.xlu0.b32.cont [9/16] 0.0, 128
    %1430 = vxpose.xlu0.b32.cont [10/16] 0.0, 128
    %1431 = vxpose.xlu0.b32.cont [11/16] 0.0, 128
    %1432 = vxpose.xlu0.b32.cont [12/16] 0.0, 128
    %1433 = vxpose.xlu0.b32.cont [13/16] 0.0, 128
    %1434 = vxpose.xlu0.b32.cont [14/16] 0.0, 128
    %1435 = vxpose.xlu0.b32.cont [15/16] 0.0, 128
    %1436 = vxpose.xlu0.b32.end [16/16] 0.0, 128
    %v1437 = vpop.trf.xlu0
    %v1438 = vpop.trf.xlu0
    %v1439 = vpop.trf.xlu0
    %v1440 = vpop.trf.xlu0
    %v1441 = vpop.trf.xlu0
    %v1442 = vpop.trf.xlu0
    %v1443 = vpop.trf.xlu0
    %v1444 = vpop.trf.xlu0
    %v1445 = vpop.trf.xlu0
    %v1446 = vpop.trf.xlu0
    %v1447 = vpop.trf.xlu0
    %v1448 = vpop.trf.xlu0
    %v1449 = vpop.trf.xlu0
    %v1450 = vpop.trf.xlu0
    %v1451 = vpop.trf.xlu0
    %v1452 = vpop.trf.xlu0
    %s1453 = scalar_lea.vmem [#allocation3], 2
    %1454 = vst.msk [vmem:[%s1453] sm:$0x3] %vm796, %v1437
    // Predicated region
    $region46: #{tpu_custom_call.1} parent=1 // pred_check
      _
    $region47: #{tpu_custom_call.1} parent=1 // pred_check_branch
      %1456 = sbr.rel (0) target = $region49
    $region48: #{tpu_custom_call.1} parent=1 // pred_region
      %s1458 = ssub.s32 64, 64
      %1459 = vsyncadd [#allocation4], %s1458
      %s1460 = sshll.u32 [#allocation3], 4
      %s1461 = int_to_ptr.vmem [resolvable:$true] %s1460
      %1466 = dma.vmem_to_hbm [thread:$0]  %s1461, 64, %s11, [#allocation4], 32, 32, 2
    $region49: #{tpu_custom_call.1} parent=1 // pred_fallthru
      _
    // Predicated region
    $region50: #{tpu_custom_call.1} parent=1 // pred_check
      _
    $region51: #{tpu_custom_call.1} parent=1 // pred_check_branch
      %1468 = sbr.rel (0) target = $region53
    $region52: #{tpu_custom_call.1} parent=1 // pred_region
      %1469 = dma.done [#allocation4], 64
    $region53: #{tpu_custom_call.1} parent=1 // pred_fallthru
      _
    %1470 = vsyncpa [#allocation4], 1

</llo_original>
